<compile_context>
chip_gen: v6e
topology: v6e:2x2x1
jax: 0.10.0
libtpu: 0.0.40
codegen_flags: <defaults>
</compile_context>

<pallas_src>
import jax
import jax.numpy as jnp
import numpy as np
from jax.experimental import pallas as pl
from jax.experimental.pallas import tpu as pltpu

# ---- small test configuration (clip_out_dim=512 shrunk to 128 for the test) ----
VIEWS = 4            # args.views
C, H, W = 3, 16, 16  # rendered image size
CHW = C * H * W      # 768
DIM = 128            # dim_img == dim_prompt (stand-in for clip_out_dim)
K_FOLD = VIEWS * CHW  # 3072 : contraction dim of the fully folded matmul


# ---------------------------------------------------------------------------
# Selector + Renderer stand-in (plain JAX glue, deterministic)
# ---------------------------------------------------------------------------
def selector_renderer_standin(points, views, h, w):
    # TODO(synk): real Selector/Renderer not reproducible; deterministic smooth
    # projection of per-view rotated point statistics onto an HxW grid instead.
    azim = jnp.linspace(0.0, 2.0 * jnp.pi, views, endpoint=False)   # "selector"
    elev = jnp.full((views,), jnp.pi / 6.0)
    dist = jnp.full((views,), 1.0)
    px, py, pz = points[..., 0], points[..., 1], points[..., 2]     # [B, N]
    ca, sa = jnp.cos(azim), jnp.sin(azim)
    xr = px[:, None, :] * ca[None, :, None] - py[:, None, :] * sa[None, :, None]
    yr = px[:, None, :] * sa[None, :, None] + py[:, None, :] * ca[None, :, None]
    zr = pz[:, None, :] * jnp.cos(elev)[None, :, None] + dist[None, :, None]
    stats = jnp.stack([xr.mean(-1), yr.mean(-1), zr.mean(-1)], axis=-1)  # [B, V, 3]
    gy = jnp.linspace(-1.0, 1.0, h)
    gx = jnp.linspace(-1.0, 1.0, w)
    imgs = jnp.sin(stats[..., :, None, None] * 3.0
                   + gy[None, None, None, :, None] * 2.0
                   + gx[None, None, None, None, :])                  # [B, V, 3, H, W]
    return imgs.astype(jnp.float32)


# ---------------------------------------------------------------------------
# Fused Pallas kernel: one grid step = one tile of tb point clouds.
#
#   h   = x_tile @ Wfold + bfold     (bf16 in, f32 accumulate; M=tb, K=3072, N=256)
#   out = 0.5 * (relu(h[:, :DIM]) + relu(h[:, DIM:]))   -> (tb, DIM) lane-dense block
#
# Encoder weights/biases, fusion ratios and adapter weights/biases are all folded
# into Wfold / bfold in the wrapper (exact algebraic fold, only bf16 rounding order
# changes).
# ---------------------------------------------------------------------------
def _fused_encoder_adapter_kernel(x_ref, w_ref, b_ref, out_ref):
    h = jnp.dot(x_ref[...], w_ref[...], preferred_element_type=jnp.float32)  # [tb, 2*DIM]
    h = h + b_ref[...]                                                        # bias once
    h = jnp.maximum(h, 0.0)                                                   # both ReLUs
    out_ref[...] = 0.5 * (h[:, :DIM] + h[:, DIM:])


def _choose_tb(B, tb):
    """Pick a batch-tile size: 2-step grid when possible (v7x dual TC), else 1 step."""
    if tb is None:
        tb = B // 2 if (B % 16 == 0) else B
    if tb == B or (B % tb == 0 and tb % 8 == 0):
        return tb
    # largest divisor of B that is a multiple of 8 and <= requested tb
    for cand in range(min(tb, B), 7, -1):
        if B % cand == 0 and cand % 8 == 0:
            return cand
    return B  # block dims == full array dims is always legal


def few_shot_cil_wo_rn2_encoder(points, params, tb=None):
    B = points.shape[0]
    tb = _choose_tb(B, tb)
    nt = B // tb

    # Pseudo-render; flat, view-major rows (contiguous reshape, no transpose pass).
    imgs = selector_renderer_standin(points, VIEWS, H, W)          # [B, V, C, H, W]
    x = imgs.reshape(B, K_FOLD).astype(jnp.bfloat16)               # [B, V*CHW] bf16

    # ---- one-time algebraic folds (wrapper side) ----------------------------
    # adapter weights with fusion ratios folded in, per view: (V, DIM, DIM)
    wa1_3 = params["wa1"].reshape(VIEWS, DIM, DIM) * params["r1"][:, :, None]
    wa2_3 = params["wa2"].reshape(VIEWS, DIM, DIM) * params["r2"][:, :, None]
    # encoder folded into the adapters:  Wfold1[v] = w_pre @ (r1_v * wa1_v)
    wf1 = jnp.einsum("kd,vdn->vkn", params["w_pre"], wa1_3).reshape(K_FOLD, DIM)
    wf2 = jnp.einsum("kd,vdn->vkn", params["w_ori"], wa2_3).reshape(K_FOLD, DIM)
    w_fold = jnp.concatenate([wf1, wf2], axis=1).astype(jnp.bfloat16)   # [3072, 256]
    # effective biases: ba + b_enc @ sum_v (r_v * wa_v)
    b1 = params["ba1"] + params["b_pre"] @ wa1_3.sum(axis=0)
    b2 = params["ba2"] + params["b_ori"] @ wa2_3.sum(axis=0)
    b_fold = jnp.concatenate([b1, b2], axis=1).astype(jnp.float32)      # [1, 256]

    const = lambda i: (0, 0)
    out = pl.pallas_call(
        _fused_encoder_adapter_kernel,
        out_shape=jax.ShapeDtypeStruct((B, DIM), jnp.float32),
        grid_spec=pltpu.PrefetchScalarGridSpec(
            num_scalar_prefetch=0,
            grid=(nt,),
            in_specs=[
                pl.BlockSpec((tb, K_FOLD), lambda i: (i, 0)),   # streamed image tile (bf16)
                pl.BlockSpec((K_FOLD, 2 * DIM), const),         # folded weight (bf16, const)
                pl.BlockSpec((1, 2 * DIM), const),              # folded bias (f32, const)
            ],
            out_specs=pl.BlockSpec((tb, DIM), lambda i: (i, 0)),  # lane/sublane-dense block
        ),
        compiler_params=pltpu.CompilerParams(dimension_semantics=("parallel",)),
    )(x, w_fold, b_fold)
    return out


# ---------------------------------------------------------------------------
# Deterministic parameter init (non-zero biases / distinct ratios to exercise folds)
# ---------------------------------------------------------------------------
def init_params(key):
    ks = jax.random.split(key, 8)

    def xavier(k, shape):
        lim = np.sqrt(6.0 / (shape[0] + shape[1]))
        return jax.random.uniform(k, shape, jnp.float32, -lim, lim)

    return dict(
        w_pre=xavier(ks[0], (CHW, DIM)),
        b_pre=0.05 * jax.random.normal(ks[4], (1, DIM), jnp.float32),
        w_ori=xavier(ks[1], (CHW, DIM)),
        b_ori=0.05 * jax.random.normal(ks[5], (1, DIM), jnp.float32),
        r1=jnp.linspace(0.3, 0.9, VIEWS, dtype=jnp.float32)[:, None],   # fusion ratios
        wa1=xavier(ks[2], (VIEWS * DIM, DIM)),
        ba1=0.05 * jax.random.normal(ks[6], (1, DIM), jnp.float32),
        r2=jnp.linspace(0.9, 0.3, VIEWS, dtype=jnp.float32)[:, None],
        wa2=xavier(ks[3], (VIEWS * DIM, DIM)),
        ba2=0.05 * jax.random.normal(ks[7], (1, DIM), jnp.float32),
    )


# ---------------------------------------------------------------------------
# Pure-JAX reference of the same math (unfolded two-stage form, as in the module)
# ---------------------------------------------------------------------------
def reference(points, params):
    B = points.shape[0]
    imgs = selector_renderer_standin(points, VIEWS, H, W).reshape(B * VIEWS, CHW)
    x = imgs.astype(jnp.bfloat16)
    f1 = jnp.dot(x, params["w_pre"].astype(jnp.bfloat16),
                 preferred_element_type=jnp.float32) + params["b_pre"]
    f2 = jnp.dot(x, params["w_ori"].astype(jnp.bfloat16),
                 preferred_element_type=jnp.float32) + params["b_ori"]

    def adapter(f, r, wa, ba):
        g = f.reshape(B, VIEWS, DIM) * r[None, :, 0, None]
        g = g.reshape(B, VIEWS * DIM)
        return jnp.maximum(jnp.dot(g, wa, precision=jax.lax.Precision.HIGHEST) + ba, 0.0)

    a1 = adapter(f1, params["r1"], params["wa1"], params["ba1"])
    a2 = adapter(f2, params["r2"], params["wa2"], params["ba2"])
    return 0.5 * (a1 + a2)


if __name__ == "__main__":
    key = jax.random.PRNGKey(0)
    kp, kx = jax.random.split(key)
    params = init_params(kp)

    B, N_PTS = 64, 64        # 64 point clouds -> grid=(2,) with tb=32 (both v7x TCs busy)
    points = jax.random.normal(kx, (B, N_PTS, 3), jnp.float32)

    fwd = jax.jit(few_shot_cil_wo_rn2_encoder)
    out = jax.block_until_ready(fwd(points, params))
    ref = jax.block_until_ready(reference(points, params))

    assert out.shape == (B, DIM), out.shape
    # Fully folded bf16 matmul vs. the unfolded two-stage reference: the algebra is
    # exact, but bf16 rounding order differs (encoder fold + single K=3072 sweep),
    # so tolerance is relaxed slightly.
    np.testing.assert_allclose(np.asarray(out), np.asarray(ref), rtol=3e-2, atol=3e-2)
    print("KERNEL_OK")
</pallas_src>

<mosaic_0001>
module attributes {stable_mosaic.version = 11 : i64} {
  func.func @_fused_encoder_adapter_kernel(%arg0: i32, %arg1: memref<32x3072xbf16, #tpu.memory_space<vmem>>, %arg2: memref<3072x256xbf16, #tpu.memory_space<vmem>>, %arg3: memref<1x256xf32, #tpu.memory_space<vmem>>, %arg4: memref<32x128xf32, #tpu.memory_space<vmem>>) attributes {dimension_semantics = [#tpu.dimension_semantics<parallel>], iteration_bounds = array<i64: 2>, scalar_prefetch = 0 : i64, scratch_operands = 0 : i64, tpu.core_type = #tpu.core_type<tc>, window_params = [{transform_indices = @transform_0, window_bounds = array<i64: 32, 3072>}, {pipeline_mode = #tpu.pipeline_mode<synchronous>, transform_indices = @transform_1, window_bounds = array<i64: 3072, 256>}, {pipeline_mode = #tpu.pipeline_mode<synchronous>, transform_indices = @transform_2, window_bounds = array<i64: 1, 256>}, {transform_indices = @transform_3, window_bounds = array<i64: 32, 128>}]} {
    %c0 = arith.constant 0 : index
    %c0_0 = arith.constant 0 : index
    %0 = vector.load %arg1[%c0, %c0_0] : memref<32x3072xbf16, #tpu.memory_space<vmem>>, vector<32x3072xbf16>
    %c0_1 = arith.constant 0 : index
    %c0_2 = arith.constant 0 : index
    %1 = vector.load %arg2[%c0_1, %c0_2] : memref<3072x256xbf16, #tpu.memory_space<vmem>>, vector<3072x256xbf16>
    %cst = arith.constant dense<0.000000e+00> : vector<32x256xf32>
    %2 = tpu.matmul %0, %1, %cst {dimension_numbers = #tpu.dot_dimension_numbers<[1], [0], [0], [1], [0, 0, 1, 1], [], []>} : vector<32x3072xbf16>, vector<3072x256xbf16>, vector<32x256xf32> -> vector<32x256xf32>
    %c0_3 = arith.constant 0 : index
    %c0_4 = arith.constant 0 : index
    %3 = vector.load %arg3[%c0_3, %c0_4] : memref<1x256xf32, #tpu.memory_space<vmem>>, vector<1x256xf32>
    %4 = vector.broadcast %3 : vector<1x256xf32> to vector<32x256xf32>
    %5 = arith.addf %2, %4 : vector<32x256xf32>
    %cst_5 = arith.constant 0.000000e+00 : f32
    %6 = vector.broadcast %cst_5 : f32 to vector<32x256xf32>
    %7 = arith.maximumf %5, %6 : vector<32x256xf32>
    %8 = vector.extract_strided_slice %7 {offsets = [0, 0], sizes = [32, 128], strides = [1, 1]} : vector<32x256xf32> to vector<32x128xf32>
    %9 = vector.extract_strided_slice %7 {offsets = [0, 128], sizes = [32, 128], strides = [1, 1]} : vector<32x256xf32> to vector<32x128xf32>
    %10 = arith.addf %8, %9 : vector<32x128xf32>
    %cst_6 = arith.constant 5.000000e-01 : f32
    %11 = vector.broadcast %cst_6 : f32 to vector<32x128xf32>
    %12 = arith.mulf %11, %10 : vector<32x128xf32>
    %c0_7 = arith.constant 0 : index
    %c0_8 = arith.constant 0 : index
    %13 = vector.load %arg4[%c0_7, %c0_8] : memref<32x128xf32, #tpu.memory_space<vmem>>, vector<32x128xf32>
    tpu.vector_store %arg4[%c0_7, %c0_8], %12 {strides = array<i32>} : memref<32x128xf32, #tpu.memory_space<vmem>>, vector<32x128xf32>,
    return
  }
  func.func @transform_0(%arg0: i32) -> (i32, i32) {
    %c0_i32 = arith.constant 0 : i32
    %c0_i32_0 = arith.constant 0 : i32
    return %arg0, %c0_i32 : i32, i32
  }
  func.func @transform_1(%arg0: i32) -> (i32, i32) {
    %c0_i32 = arith.constant 0 : i32
    %c0_i32_0 = arith.constant 0 : i32
    %c0_i32_1 = arith.constant 0 : i32
    return %c0_i32, %c0_i32_0 : i32, i32
  }
  func.func @transform_2(%arg0: i32) -> (i32, i32) {
    %c0_i32 = arith.constant 0 : i32
    %c0_i32_0 = arith.constant 0 : i32
    %c0_i32_1 = arith.constant 0 : i32
    return %c0_i32, %c0_i32_0 : i32, i32
  }
  func.func @transform_3(%arg0: i32) -> (i32, i32) {
    %c0_i32 = arith.constant 0 : i32
    %c0_i32_0 = arith.constant 0 : i32
    return %arg0, %c0_i32 : i32, i32
  }
}

</mosaic_0001>

<llo_original>
// kernel: few_shot_cil_wo_rn2_encoder.1
$region0: #{few_shot_cil_wo_rn2_encoder.1}
  #allocation0 [shape = 'u32[]', space=smem, size = 0x4, offset = 0x4, fixed_abs, tag = 'smem constant byte address 0x4 - core index']
  #allocation1 [shape = 'u32[144,128]{1,0:T(1,128)}', space=vmem, size = 0x12000, scoped, tag = 'internal scratch']
  %s0 = inlined_call_operand.vmem [shape: bf16[64,3072], index: 0, kind: input, shape index: {}]
  %s1 = inlined_call_operand.vmem [shape: bf16[3072,256], index: 1, kind: input, shape index: {}]
  %s2 = inlined_call_operand.vmem [shape: f32[1,256], index: 2, kind: input, shape index: {}]
  %s3 = inlined_call_operand.hbm [shape: f32[64,128], index: 3, kind: output, shape index: {}]
  %s4 = sld [smem:[#allocation0]]
  $region45: #{few_shot_cil_wo_rn2_encoder.1} parent=0
    _
  %s6 = ssub.s32 1, %s4
  %s7 = scalar_select 0, %s6, %s4
  $region1: #{few_shot_cil_wo_rn2_encoder.1} parent=0
    #allocation2 [shape = 'u8[32768]{0}', space=vmem, size = 0x8000, scoped, tag = 'output window, operand 0']
    #allocation3 [shape = 's32[2]{0}', space=sflag, size = 0x8, scoped, tag = 'scoped memory for few_shot_cil_wo_rn2_encoder.1']
    %8 = vsyncpa [#allocation3], 0
    %s9 = scalar_lea.sflag [#allocation3], 1
    %10 = vsyncpa %s9, 0
    loop: start=0, step=1, limit=4
    $region2: #{few_shot_cil_wo_rn2_encoder.1} parent=1 // loop_pre_header
      _
    $region3: #{few_shot_cil_wo_rn2_encoder.1} parent=1 // loop_header
      %s12 = sphi 0, %s16
      %p13 = scmp.ge.s32.totalorder %s12, 4
      %s22 = sphi 0, %s24
      %s25 = sphi 0, %s22
      %s26 = sphi 0, %s25
      %s42 = sphi 0, %s26
      %s46 = sphi 0, %s46
      %s48 = sphi 0, %s46
      %s49 = sphi 0, %s48
      %s63 = sphi 0, %s49
      %s67 = sphi 0, %s67
      %s69 = sphi 0, %s67
      %s70 = sphi 0, %s69
      %s84 = sphi 0, %s70
      %s90 = sphi 0, %s92
      %s93 = sphi 0, %s90
      %s94 = sphi 0, %s93
      %s110 = sphi 0, %s94
    $region4: #{few_shot_cil_wo_rn2_encoder.1} parent=1 // loop_header_branch
      %15 = sbr.rel (%p13) target = $region8
    $region5: #{few_shot_cil_wo_rn2_encoder.1} parent=1 // loop_body
      %s17 = ssub.s32 %s12, 1
      %s18 = ssub.s32 %s12, 2
      %s19 = sadd.s32 %s12, 1
      %s20 = ssub.s32 %s12, %s19
      %p21 = scmp.eq.s32.totalorder %s20, 0
      %s23 = sadd.s32 %s22, 1
      %s24 = scalar_select %p21, %s22, %s23
      %p27 = pneg %p21
      %p28 = scmp.eq.s32.totalorder %s12, 1
      %p29 = por %p27, %p28
      %p30 = scmp.ne.s32.totalorder %s22, %s25
      %p31 = scmp.eq.s32.totalorder %s12, 0
      %p32 = por %p30, %p31
      %p33 = scmp.ne.s32.totalorder %s22, %s25
      %p34 = scmp.eq.s32.totalorder %s17, 1
      %p35 = por %p33, %p34
      %p36 = scmp.ne.s32.totalorder %s25, %s26
      %p37 = scmp.eq.s32.totalorder %s17, 0
      %p38 = por %p36, %p37
      %p39 = scmp.ne.s32.totalorder %s25, %s26
      %p40 = scmp.eq.s32.totalorder %s18, 1
      %p41 = por %p39, %p40
      %p43 = scmp.ne.s32.totalorder %s26, %s42
      %p44 = scmp.eq.s32.totalorder %s18, 0
      %p45 = por %p43, %p44
      %s47 = sadd.s32 %s46, 1
      %p50 = scmp.eq.s32.totalorder %s12, 1
      %p51 = scmp.ne.s32.totalorder %s46, %s48
      %p52 = scmp.eq.s32.totalorder %s12, 0
      %p53 = por %p51, %p52
      %p54 = scmp.ne.s32.totalorder %s46, %s48
      %p55 = scmp.eq.s32.totalorder %s17, 1
      %p56 = por %p54, %p55
      %p57 = scmp.ne.s32.totalorder %s48, %s49
      %p58 = scmp.eq.s32.totalorder %s17, 0
      %p59 = por %p57, %p58
      %p60 = scmp.ne.s32.totalorder %s48, %s49
      %p61 = scmp.eq.s32.totalorder %s18, 1
      %p62 = por %p60, %p61
      %p64 = scmp.ne.s32.totalorder %s49, %s63
      %p65 = scmp.eq.s32.totalorder %s18, 0
      %p66 = por %p64, %p65
      %s68 = sadd.s32 %s67, 1
      %p71 = scmp.eq.s32.totalorder %s12, 1
      %p72 = scmp.ne.s32.totalorder %s67, %s69
      %p73 = scmp.eq.s32.totalorder %s12, 0
      %p74 = por %p72, %p73
      %p75 = scmp.ne.s32.totalorder %s67, %s69
      %p76 = scmp.eq.s32.totalorder %s17, 1
      %p77 = por %p75, %p76
      %p78 = scmp.ne.s32.totalorder %s69, %s70
      %p79 = scmp.eq.s32.totalorder %s17, 0
      %p80 = por %p78, %p79
      %p81 = scmp.ne.s32.totalorder %s69, %s70
      %p82 = scmp.eq.s32.totalorder %s18, 1
      %p83 = por %p81, %p82
      %p85 = scmp.ne.s32.totalorder %s70, %s84
      %p86 = scmp.eq.s32.totalorder %s18, 0
      %p87 = por %p85, %p86
      %s88 = ssub.s32 %s12, %s19
      %p89 = scmp.eq.s32.totalorder %s88, 0
      %s91 = sadd.s32 %s90, 1
      %s92 = scalar_select %p89, %s90, %s91
      %p95 = pneg %p89
      %p96 = scmp.eq.s32.totalorder %s12, 1
      %p97 = por %p95, %p96
      %p98 = scmp.ne.s32.totalorder %s90, %s93
      %p99 = scmp.eq.s32.totalorder %s12, 0
      %p100 = por %p98, %p99
      %p101 = scmp.ne.s32.totalorder %s90, %s93
      %p102 = scmp.eq.s32.totalorder %s17, 1
      %p103 = por %p101, %p102
      %p104 = scmp.ne.s32.totalorder %s93, %s94
      %p105 = scmp.eq.s32.totalorder %s17, 0
      %p106 = por %p104, %p105
      %p107 = scmp.ne.s32.totalorder %s93, %s94
      %p108 = scmp.eq.s32.totalorder %s18, 1
      %p109 = por %p107, %p108
      %p111 = scmp.ne.s32.totalorder %s94, %s110
      %p112 = scmp.eq.s32.totalorder %s18, 0
      %p113 = por %p111, %p112
      %p114 = scmp.le.s32.totalorder 1, %s12
      %p115 = scmp.lt.s32.totalorder %s12, 3
      %p116 = pnand %p114, %p115
      %p117 = pneg %p116
      // Predicated region
      $region9: #{few_shot_cil_wo_rn2_encoder.1} parent=5 // pred_check
        _
      $region10: #{few_shot_cil_wo_rn2_encoder.1} parent=5 // pred_check_branch
        %119 = sbr.rel (%p116) target = $region12
      $region11: #{few_shot_cil_wo_rn2_encoder.1} parent=5 // pred_region
        %s120 = ssub.s32 %s12, 1
        // Predicated region
        $region13: #{few_shot_cil_wo_rn2_encoder.1} parent=11 // pred_check
          %p121 = pneg %p59
        $region14: #{few_shot_cil_wo_rn2_encoder.1} parent=11 // pred_check_branch
          %123 = sbr.rel (%p121) target = $region16
        $region15: #{few_shot_cil_wo_rn2_encoder.1} parent=11 // pred_region
          _
        $region16: #{few_shot_cil_wo_rn2_encoder.1} parent=11 // pred_fallthru
          _
        // Predicated region
        $region17: #{few_shot_cil_wo_rn2_encoder.1} parent=11 // pred_check
          %p124 = pneg %p80
        $region18: #{few_shot_cil_wo_rn2_encoder.1} parent=11 // pred_check_branch
          %126 = sbr.rel (%p124) target = $region20
        $region19: #{few_shot_cil_wo_rn2_encoder.1} parent=11 // pred_region
          _
        $region20: #{few_shot_cil_wo_rn2_encoder.1} parent=11 // pred_fallthru
          _
      $region12: #{few_shot_cil_wo_rn2_encoder.1} parent=5 // pred_fallthru
        _
      %p127 = scmp.lt.s32.totalorder %s12, 2
      // Predicated region
      $region21: #{few_shot_cil_wo_rn2_encoder.1} parent=5 // pred_check
        %p128 = pneg %p127
      $region22: #{few_shot_cil_wo_rn2_encoder.1} parent=5 // pred_check_branch
        %130 = sbr.rel (%p128) target = $region24
      $region23: #{few_shot_cil_wo_rn2_encoder.1} parent=5 // pred_region
        // Predicated region
        $region25: #{few_shot_cil_wo_rn2_encoder.1} parent=23 // pred_check
          %p131 = pneg %p32
        $region26: #{few_shot_cil_wo_rn2_encoder.1} parent=23 // pred_check_branch
          %133 = sbr.rel (%p131) target = $region28
        $region27: #{few_shot_cil_wo_rn2_encoder.1} parent=23 // pred_region
          %s134 = smul.u32 4, %s12
          %p135 = scmp.lt.s32.totalorder %s134, 7
          %s136 = scalar_select %p135, %s134, 7
          %s137 = smul.addr %s136, 24
          %s138 = smul.addr %s137, 4
          %s139 = scalar_lea.vmem %s0, %s138
          %s140 = smul.u32 4, %s12
        $region28: #{few_shot_cil_wo_rn2_encoder.1} parent=23 // pred_fallthru
          _
      $region24: #{few_shot_cil_wo_rn2_encoder.1} parent=5 // pred_fallthru
        _
      %p141 = scmp.le.s32.totalorder 1, %s12
      %p142 = scmp.lt.s32.totalorder %s12, 3
      %p143 = pnand %p141, %p142
      %p144 = pneg %p143
      // Predicated region
      $region29: #{few_shot_cil_wo_rn2_encoder.1} parent=5 // pred_check
        _
      $region30: #{few_shot_cil_wo_rn2_encoder.1} parent=5 // pred_check_branch
        %146 = sbr.rel (%p143) target = $region32
      $region31: #{few_shot_cil_wo_rn2_encoder.1} parent=5 // pred_region
        %s147 = ssub.s32 %s12, 1
        %s148 = smul.u32 4, %s17
        %p149 = scmp.lt.s32.totalorder %s148, 7
        %s150 = scalar_select %p149, %s148, 7
        %s151 = smul.addr %s150, 24
        %s152 = smul.addr %s151, 4
        %s153 = scalar_lea.vmem %s0, %s152
        %p154 = pneg %p38
        %p155 = pneg %p35
        %p156 = pneg %p59
        %p157 = pneg %p56
        %p158 = pneg %p80
        %p159 = pneg %p77
        %p160 = pneg %p106
        %p161 = pneg %p103
        %s162 = sand.u32 %s93, 1
        %s163 = scalar_lea.sflag [#allocation3], %s162
        %s164 = sand.u32 %s93, 1
        %s165 = smul.addr %s164, 32
        %s166 = scalar_lea.vmem [#allocation2], %s165
        %s167 = smul.u32 4, %s17
        %p168 = scmp.lt.s32.totalorder %s167, 7
        %s169 = scalar_select %p168, %s167, 7
        %s170 = smul.addr %s169, 24
        %s171 = smul.addr %s170, 4
        %s172 = scalar_lea.vmem %s0, %s171
        %s173 = smul.u32 4, %s17
        %s174 = smul.u32 4, %s17
        %v175 = vld [vmem:[%s172] sm:$0xff]
        %v176 = vld [vmem:[%s172 + $0x8] sm:$0xff]
        %v177 = vld [vmem:[%s172 + $0x10] sm:$0xff]
        %v178 = vld [vmem:[%s172 + $0x18] sm:$0xff]
        %v179 = vld [vmem:[%s172 + $0x20] sm:$0xff]
        %v180 = vld [vmem:[%s172 + $0x28] sm:$0xff]
        %v181 = vld [vmem:[%s172 + $0x30] sm:$0xff]
        %v182 = vld [vmem:[%s172 + $0x38] sm:$0xff]
        %v183 = vld [vmem:[%s172 + $0x40] sm:$0xff]
        %v184 = vld [vmem:[%s172 + $0x48] sm:$0xff]
        %v185 = vld [vmem:[%s172 + $0x50] sm:$0xff]
        %v186 = vld [vmem:[%s172 + $0x58] sm:$0xff]
        %v187 = vld [vmem:[%s172 + $0x60] sm:$0xff]
        %v188 = vld [vmem:[%s172 + $0x68] sm:$0xff]
        %v189 = vld [vmem:[%s172 + $0x70] sm:$0xff]
        %v190 = vld [vmem:[%s172 + $0x78] sm:$0xff]
        %v191 = vld [vmem:[%s172 + $0x80] sm:$0xff]
        %v192 = vld [vmem:[%s172 + $0x88] sm:$0xff]
        %v193 = vld [vmem:[%s172 + $0x90] sm:$0xff]
        %v194 = vld [vmem:[%s172 + $0x98] sm:$0xff]
        %v195 = vld [vmem:[%s172 + $0xa0] sm:$0xff]
        %v196 = vld [vmem:[%s172 + $0xa8] sm:$0xff]
        %v197 = vld [vmem:[%s172 + $0xb0] sm:$0xff]
        %v198 = vld [vmem:[%s172 + $0xb8] sm:$0xff]
        %v199 = vld [vmem:[%s172 + $0xc0] sm:$0xff]
        %v200 = vld [vmem:[%s172 + $0xc8] sm:$0xff]
        %v201 = vld [vmem:[%s172 + $0xd0] sm:$0xff]
        %v202 = vld [vmem:[%s172 + $0xd8] sm:$0xff]
        %v203 = vld [vmem:[%s172 + $0xe0] sm:$0xff]
        %v204 = vld [vmem:[%s172 + $0xe8] sm:$0xff]
        %v205 = vld [vmem:[%s172 + $0xf0] sm:$0xff]
        %v206 = vld [vmem:[%s172 + $0xf8] sm:$0xff]
        %v207 = vld [vmem:[%s172 + $0x100] sm:$0xff]
        %v208 = vld [vmem:[%s172 + $0x108] sm:$0xff]
        %v209 = vld [vmem:[%s172 + $0x110] sm:$0xff]
        %v210 = vld [vmem:[%s172 + $0x118] sm:$0xff]
        %v211 = vld [vmem:[%s172 + $0x120] sm:$0xff]
        %v212 = vld [vmem:[%s172 + $0x128] sm:$0xff]
        %v213 = vld [vmem:[%s172 + $0x130] sm:$0xff]
        %v214 = vld [vmem:[%s172 + $0x138] sm:$0xff]
        %v215 = vld [vmem:[%s172 + $0x140] sm:$0xff]
        %v216 = vld [vmem:[%s172 + $0x148] sm:$0xff]
        %v217 = vld [vmem:[%s172 + $0x150] sm:$0xff]
        %v218 = vld [vmem:[%s172 + $0x158] sm:$0xff]
        %v219 = vld [vmem:[%s172 + $0x160] sm:$0xff]
        %v220 = vld [vmem:[%s172 + $0x168] sm:$0xff]
        %v221 = vld [vmem:[%s172 + $0x170] sm:$0xff]
        %v222 = vld [vmem:[%s172 + $0x178] sm:$0xff]
        %v223 = vld [vmem:[%s1] sm:$0xff]
        %v224 = vld [vmem:[%s1 + $0x8] sm:$0xff]
        %v225 = vld [vmem:[%s1 + $0x10] sm:$0xff]
        %v226 = vld [vmem:[%s1 + $0x18] sm:$0xff]
        %v227 = vld [vmem:[%s1 + $0x20] sm:$0xff]
        %v228 = vld [vmem:[%s1 + $0x28] sm:$0xff]
        %v229 = vld [vmem:[%s1 + $0x30] sm:$0xff]
        %v230 = vld [vmem:[%s1 + $0x38] sm:$0xff]
        %v231 = vld [vmem:[%s1 + $0x40] sm:$0xff]
        %v232 = vld [vmem:[%s1 + $0x48] sm:$0xff]
        %v233 = vld [vmem:[%s1 + $0x50] sm:$0xff]
        %v234 = vld [vmem:[%s1 + $0x58] sm:$0xff]
        %v235 = vld [vmem:[%s1 + $0x60] sm:$0xff]
        %v236 = vld [vmem:[%s1 + $0x68] sm:$0xff]
        %v237 = vld [vmem:[%s1 + $0x70] sm:$0xff]
        %v238 = vld [vmem:[%s1 + $0x78] sm:$0xff]
        %v239 = vld [vmem:[%s1 + $0x80] sm:$0xff]
        %v240 = vld [vmem:[%s1 + $0x88] sm:$0xff]
        %v241 = vld [vmem:[%s1 + $0x90] sm:$0xff]
        %v242 = vld [vmem:[%s1 + $0x98] sm:$0xff]
        %v243 = vld [vmem:[%s1 + $0xa0] sm:$0xff]
        %v244 = vld [vmem:[%s1 + $0xa8] sm:$0xff]
        %v245 = vld [vmem:[%s1 + $0xb0] sm:$0xff]
        %v246 = vld [vmem:[%s1 + $0xb8] sm:$0xff]
        %v247 = vld [vmem:[%s1 + $0xc0] sm:$0xff]
        %v248 = vld [vmem:[%s1 + $0xc8] sm:$0xff]
        %v249 = vld [vmem:[%s1 + $0xd0] sm:$0xff]
        %v250 = vld [vmem:[%s1 + $0xd8] sm:$0xff]
        %v251 = vld [vmem:[%s1 + $0xe0] sm:$0xff]
        %v252 = vld [vmem:[%s1 + $0xe8] sm:$0xff]
        %v253 = vld [vmem:[%s1 + $0xf0] sm:$0xff]
        %v254 = vld [vmem:[%s1 + $0xf8] sm:$0xff]
        %v255 = vld [vmem:[%s1 + $0x100] sm:$0xff]
        %v256 = vld [vmem:[%s1 + $0x108] sm:$0xff]
        %v257 = vld [vmem:[%s1 + $0x110] sm:$0xff]
        %v258 = vld [vmem:[%s1 + $0x118] sm:$0xff]
        %v259 = vld [vmem:[%s1 + $0x120] sm:$0xff]
        %v260 = vld [vmem:[%s1 + $0x128] sm:$0xff]
        %v261 = vld [vmem:[%s1 + $0x130] sm:$0xff]
        %v262 = vld [vmem:[%s1 + $0x138] sm:$0xff]
        %v263 = vld [vmem:[%s1 + $0x140] sm:$0xff]
        %v264 = vld [vmem:[%s1 + $0x148] sm:$0xff]
        %v265 = vld [vmem:[%s1 + $0x150] sm:$0xff]
        %v266 = vld [vmem:[%s1 + $0x158] sm:$0xff]
        %v267 = vld [vmem:[%s1 + $0x160] sm:$0xff]
        %v268 = vld [vmem:[%s1 + $0x168] sm:$0xff]
        %v269 = vld [vmem:[%s1 + $0x170] sm:$0xff]
        %v270 = vld [vmem:[%s1 + $0x178] sm:$0xff]
        %v271 = vld [vmem:[%s1 + $0x180] sm:$0xff]
        %v272 = vld [vmem:[%s1 + $0x188] sm:$0xff]
        %v273 = vld [vmem:[%s1 + $0x190] sm:$0xff]
        %v274 = vld [vmem:[%s1 + $0x198] sm:$0xff]
        %v275 = vld [vmem:[%s1 + $0x1a0] sm:$0xff]
        %v276 = vld [vmem:[%s1 + $0x1a8] sm:$0xff]
        %v277 = vld [vmem:[%s1 + $0x1b0] sm:$0xff]
        %v278 = vld [vmem:[%s1 + $0x1b8] sm:$0xff]
        %v279 = vld [vmem:[%s1 + $0x1c0] sm:$0xff]
        %v280 = vld [vmem:[%s1 + $0x1c8] sm:$0xff]
        %v281 = vld [vmem:[%s1 + $0x1d0] sm:$0xff]
        %v282 = vld [vmem:[%s1 + $0x1d8] sm:$0xff]
        %v283 = vld [vmem:[%s1 + $0x1e0] sm:$0xff]
        %v284 = vld [vmem:[%s1 + $0x1e8] sm:$0xff]
        %v285 = vld [vmem:[%s1 + $0x1f0] sm:$0xff]
        %v286 = vld [vmem:[%s1 + $0x1f8] sm:$0xff]
        %v287 = vld [vmem:[%s1 + $0x200] sm:$0xff]
        %v288 = vld [vmem:[%s1 + $0x208] sm:$0xff]
        %v289 = vld [vmem:[%s1 + $0x210] sm:$0xff]
        %v290 = vld [vmem:[%s1 + $0x218] sm:$0xff]
        %v291 = vld [vmem:[%s1 + $0x220] sm:$0xff]
        %v292 = vld [vmem:[%s1 + $0x228] sm:$0xff]
        %v293 = vld [vmem:[%s1 + $0x230] sm:$0xff]
        %v294 = vld [vmem:[%s1 + $0x238] sm:$0xff]
        %v295 = vld [vmem:[%s1 + $0x240] sm:$0xff]
        %v296 = vld [vmem:[%s1 + $0x248] sm:$0xff]
        %v297 = vld [vmem:[%s1 + $0x250] sm:$0xff]
        %v298 = vld [vmem:[%s1 + $0x258] sm:$0xff]
        %v299 = vld [vmem:[%s1 + $0x260] sm:$0xff]
        %v300 = vld [vmem:[%s1 + $0x268] sm:$0xff]
        %v301 = vld [vmem:[%s1 + $0x270] sm:$0xff]
        %v302 = vld [vmem:[%s1 + $0x278] sm:$0xff]
        %v303 = vld [vmem:[%s1 + $0x280] sm:$0xff]
        %v304 = vld [vmem:[%s1 + $0x288] sm:$0xff]
        %v305 = vld [vmem:[%s1 + $0x290] sm:$0xff]
        %v306 = vld [vmem:[%s1 + $0x298] sm:$0xff]
        %v307 = vld [vmem:[%s1 + $0x2a0] sm:$0xff]
        %v308 = vld [vmem:[%s1 + $0x2a8] sm:$0xff]
        %v309 = vld [vmem:[%s1 + $0x2b0] sm:$0xff]
        %v310 = vld [vmem:[%s1 + $0x2b8] sm:$0xff]
        %v311 = vld [vmem:[%s1 + $0x2c0] sm:$0xff]
        %v312 = vld [vmem:[%s1 + $0x2c8] sm:$0xff]
        %v313 = vld [vmem:[%s1 + $0x2d0] sm:$0xff]
        %v314 = vld [vmem:[%s1 + $0x2d8] sm:$0xff]
        %v315 = vld [vmem:[%s1 + $0x2e0] sm:$0xff]
        %v316 = vld [vmem:[%s1 + $0x2e8] sm:$0xff]
        %v317 = vld [vmem:[%s1 + $0x2f0] sm:$0xff]
        %v318 = vld [vmem:[%s1 + $0x2f8] sm:$0xff]
        %v319 = vld [vmem:[%s1 + $0x300] sm:$0xff]
        %v320 = vld [vmem:[%s1 + $0x308] sm:$0xff]
        %v321 = vld [vmem:[%s1 + $0x310] sm:$0xff]
        %v322 = vld [vmem:[%s1 + $0x318] sm:$0xff]
        %v323 = vld [vmem:[%s1 + $0x320] sm:$0xff]
        %v324 = vld [vmem:[%s1 + $0x328] sm:$0xff]
        %v325 = vld [vmem:[%s1 + $0x330] sm:$0xff]
        %v326 = vld [vmem:[%s1 + $0x338] sm:$0xff]
        %v327 = vld [vmem:[%s1 + $0x340] sm:$0xff]
        %v328 = vld [vmem:[%s1 + $0x348] sm:$0xff]
        %v329 = vld [vmem:[%s1 + $0x350] sm:$0xff]
        %v330 = vld [vmem:[%s1 + $0x358] sm:$0xff]
        %v331 = vld [vmem:[%s1 + $0x360] sm:$0xff]
        %v332 = vld [vmem:[%s1 + $0x368] sm:$0xff]
        %v333 = vld [vmem:[%s1 + $0x370] sm:$0xff]
        %v334 = vld [vmem:[%s1 + $0x378] sm:$0xff]
        %v335 = vld [vmem:[%s1 + $0x380] sm:$0xff]
        %v336 = vld [vmem:[%s1 + $0x388] sm:$0xff]
        %v337 = vld [vmem:[%s1 + $0x390] sm:$0xff]
        %v338 = vld [vmem:[%s1 + $0x398] sm:$0xff]
        %v339 = vld [vmem:[%s1 + $0x3a0] sm:$0xff]
        %v340 = vld [vmem:[%s1 + $0x3a8] sm:$0xff]
        %v341 = vld [vmem:[%s1 + $0x3b0] sm:$0xff]
        %v342 = vld [vmem:[%s1 + $0x3b8] sm:$0xff]
        %v343 = vld [vmem:[%s1 + $0x3c0] sm:$0xff]
        %v344 = vld [vmem:[%s1 + $0x3c8] sm:$0xff]
        %v345 = vld [vmem:[%s1 + $0x3d0] sm:$0xff]
        %v346 = vld [vmem:[%s1 + $0x3d8] sm:$0xff]
        %v347 = vld [vmem:[%s1 + $0x3e0] sm:$0xff]
        %v348 = vld [vmem:[%s1 + $0x3e8] sm:$0xff]
        %v349 = vld [vmem:[%s1 + $0x3f0] sm:$0xff]
        %v350 = vld [vmem:[%s1 + $0x3f8] sm:$0xff]
        %v351 = vld [vmem:[%s1 + $0x400] sm:$0xff]
        %v352 = vld [vmem:[%s1 + $0x408] sm:$0xff]
        %v353 = vld [vmem:[%s1 + $0x410] sm:$0xff]
        %v354 = vld [vmem:[%s1 + $0x418] sm:$0xff]
        %v355 = vld [vmem:[%s1 + $0x420] sm:$0xff]
        %v356 = vld [vmem:[%s1 + $0x428] sm:$0xff]
        %v357 = vld [vmem:[%s1 + $0x430] sm:$0xff]
        %v358 = vld [vmem:[%s1 + $0x438] sm:$0xff]
        %v359 = vld [vmem:[%s1 + $0x440] sm:$0xff]
        %v360 = vld [vmem:[%s1 + $0x448] sm:$0xff]
        %v361 = vld [vmem:[%s1 + $0x450] sm:$0xff]
        %v362 = vld [vmem:[%s1 + $0x458] sm:$0xff]
        %v363 = vld [vmem:[%s1 + $0x460] sm:$0xff]
        %v364 = vld [vmem:[%s1 + $0x468] sm:$0xff]
        %v365 = vld [vmem:[%s1 + $0x470] sm:$0xff]
        %v366 = vld [vmem:[%s1 + $0x478] sm:$0xff]
        %v367 = vld [vmem:[%s1 + $0x480] sm:$0xff]
        %v368 = vld [vmem:[%s1 + $0x488] sm:$0xff]
        %v369 = vld [vmem:[%s1 + $0x490] sm:$0xff]
        %v370 = vld [vmem:[%s1 + $0x498] sm:$0xff]
        %v371 = vld [vmem:[%s1 + $0x4a0] sm:$0xff]
        %v372 = vld [vmem:[%s1 + $0x4a8] sm:$0xff]
        %v373 = vld [vmem:[%s1 + $0x4b0] sm:$0xff]
        %v374 = vld [vmem:[%s1 + $0x4b8] sm:$0xff]
        %v375 = vld [vmem:[%s1 + $0x4c0] sm:$0xff]
        %v376 = vld [vmem:[%s1 + $0x4c8] sm:$0xff]
        %v377 = vld [vmem:[%s1 + $0x4d0] sm:$0xff]
        %v378 = vld [vmem:[%s1 + $0x4d8] sm:$0xff]
        %v379 = vld [vmem:[%s1 + $0x4e0] sm:$0xff]
        %v380 = vld [vmem:[%s1 + $0x4e8] sm:$0xff]
        %v381 = vld [vmem:[%s1 + $0x4f0] sm:$0xff]
        %v382 = vld [vmem:[%s1 + $0x4f8] sm:$0xff]
        %v383 = vld [vmem:[%s1 + $0x500] sm:$0xff]
        %v384 = vld [vmem:[%s1 + $0x508] sm:$0xff]
        %v385 = vld [vmem:[%s1 + $0x510] sm:$0xff]
        %v386 = vld [vmem:[%s1 + $0x518] sm:$0xff]
        %v387 = vld [vmem:[%s1 + $0x520] sm:$0xff]
        %v388 = vld [vmem:[%s1 + $0x528] sm:$0xff]
        %v389 = vld [vmem:[%s1 + $0x530] sm:$0xff]
        %v390 = vld [vmem:[%s1 + $0x538] sm:$0xff]
        %v391 = vld [vmem:[%s1 + $0x540] sm:$0xff]
        %v392 = vld [vmem:[%s1 + $0x548] sm:$0xff]
        %v393 = vld [vmem:[%s1 + $0x550] sm:$0xff]
        %v394 = vld [vmem:[%s1 + $0x558] sm:$0xff]
        %v395 = vld [vmem:[%s1 + $0x560] sm:$0xff]
        %v396 = vld [vmem:[%s1 + $0x568] sm:$0xff]
        %v397 = vld [vmem:[%s1 + $0x570] sm:$0xff]
        %v398 = vld [vmem:[%s1 + $0x578] sm:$0xff]
        %v399 = vld [vmem:[%s1 + $0x580] sm:$0xff]
        %v400 = vld [vmem:[%s1 + $0x588] sm:$0xff]
        %v401 = vld [vmem:[%s1 + $0x590] sm:$0xff]
        %v402 = vld [vmem:[%s1 + $0x598] sm:$0xff]
        %v403 = vld [vmem:[%s1 + $0x5a0] sm:$0xff]
        %v404 = vld [vmem:[%s1 + $0x5a8] sm:$0xff]
        %v405 = vld [vmem:[%s1 + $0x5b0] sm:$0xff]
        %v406 = vld [vmem:[%s1 + $0x5b8] sm:$0xff]
        %v407 = vld [vmem:[%s1 + $0x5c0] sm:$0xff]
        %v408 = vld [vmem:[%s1 + $0x5c8] sm:$0xff]
        %v409 = vld [vmem:[%s1 + $0x5d0] sm:$0xff]
        %v410 = vld [vmem:[%s1 + $0x5d8] sm:$0xff]
        %v411 = vld [vmem:[%s1 + $0x5e0] sm:$0xff]
        %v412 = vld [vmem:[%s1 + $0x5e8] sm:$0xff]
        %v413 = vld [vmem:[%s1 + $0x5f0] sm:$0xff]
        %v414 = vld [vmem:[%s1 + $0x5f8] sm:$0xff]
        %v415 = vld [vmem:[%s1 + $0x600] sm:$0xff]
        %v416 = vld [vmem:[%s1 + $0x608] sm:$0xff]
        %v417 = vld [vmem:[%s1 + $0x610] sm:$0xff]
        %v418 = vld [vmem:[%s1 + $0x618] sm:$0xff]
        %v419 = vld [vmem:[%s1 + $0x620] sm:$0xff]
        %v420 = vld [vmem:[%s1 + $0x628] sm:$0xff]
        %v421 = vld [vmem:[%s1 + $0x630] sm:$0xff]
        %v422 = vld [vmem:[%s1 + $0x638] sm:$0xff]
        %v423 = vld [vmem:[%s1 + $0x640] sm:$0xff]
        %v424 = vld [vmem:[%s1 + $0x648] sm:$0xff]
        %v425 = vld [vmem:[%s1 + $0x650] sm:$0xff]
        %v426 = vld [vmem:[%s1 + $0x658] sm:$0xff]
        %v427 = vld [vmem:[%s1 + $0x660] sm:$0xff]
        %v428 = vld [vmem:[%s1 + $0x668] sm:$0xff]
        %v429 = vld [vmem:[%s1 + $0x670] sm:$0xff]
        %v430 = vld [vmem:[%s1 + $0x678] sm:$0xff]
        %v431 = vld [vmem:[%s1 + $0x680] sm:$0xff]
        %v432 = vld [vmem:[%s1 + $0x688] sm:$0xff]
        %v433 = vld [vmem:[%s1 + $0x690] sm:$0xff]
        %v434 = vld [vmem:[%s1 + $0x698] sm:$0xff]
        %v435 = vld [vmem:[%s1 + $0x6a0] sm:$0xff]
        %v436 = vld [vmem:[%s1 + $0x6a8] sm:$0xff]
        %v437 = vld [vmem:[%s1 + $0x6b0] sm:$0xff]
        %v438 = vld [vmem:[%s1 + $0x6b8] sm:$0xff]
        %v439 = vld [vmem:[%s1 + $0x6c0] sm:$0xff]
        %v440 = vld [vmem:[%s1 + $0x6c8] sm:$0xff]
        %v441 = vld [vmem:[%s1 + $0x6d0] sm:$0xff]
        %v442 = vld [vmem:[%s1 + $0x6d8] sm:$0xff]
        %v443 = vld [vmem:[%s1 + $0x6e0] sm:$0xff]
        %v444 = vld [vmem:[%s1 + $0x6e8] sm:$0xff]
        %v445 = vld [vmem:[%s1 + $0x6f0] sm:$0xff]
        %v446 = vld [vmem:[%s1 + $0x6f8] sm:$0xff]
        %v447 = vld [vmem:[%s1 + $0x700] sm:$0xff]
        %v448 = vld [vmem:[%s1 + $0x708] sm:$0xff]
        %v449 = vld [vmem:[%s1 + $0x710] sm:$0xff]
        %v450 = vld [vmem:[%s1 + $0x718] sm:$0xff]
        %v451 = vld [vmem:[%s1 + $0x720] sm:$0xff]
        %v452 = vld [vmem:[%s1 + $0x728] sm:$0xff]
        %v453 = vld [vmem:[%s1 + $0x730] sm:$0xff]
        %v454 = vld [vmem:[%s1 + $0x738] sm:$0xff]
        %v455 = vld [vmem:[%s1 + $0x740] sm:$0xff]
        %v456 = vld [vmem:[%s1 + $0x748] sm:$0xff]
        %v457 = vld [vmem:[%s1 + $0x750] sm:$0xff]
        %v458 = vld [vmem:[%s1 + $0x758] sm:$0xff]
        %v459 = vld [vmem:[%s1 + $0x760] sm:$0xff]
        %v460 = vld [vmem:[%s1 + $0x768] sm:$0xff]
        %v461 = vld [vmem:[%s1 + $0x770] sm:$0xff]
        %v462 = vld [vmem:[%s1 + $0x778] sm:$0xff]
        %v463 = vld [vmem:[%s1 + $0x780] sm:$0xff]
        %v464 = vld [vmem:[%s1 + $0x788] sm:$0xff]
        %v465 = vld [vmem:[%s1 + $0x790] sm:$0xff]
        %v466 = vld [vmem:[%s1 + $0x798] sm:$0xff]
        %v467 = vld [vmem:[%s1 + $0x7a0] sm:$0xff]
        %v468 = vld [vmem:[%s1 + $0x7a8] sm:$0xff]
        %v469 = vld [vmem:[%s1 + $0x7b0] sm:$0xff]
        %v470 = vld [vmem:[%s1 + $0x7b8] sm:$0xff]
        %v471 = vld [vmem:[%s1 + $0x7c0] sm:$0xff]
        %v472 = vld [vmem:[%s1 + $0x7c8] sm:$0xff]
        %v473 = vld [vmem:[%s1 + $0x7d0] sm:$0xff]
        %v474 = vld [vmem:[%s1 + $0x7d8] sm:$0xff]
        %v475 = vld [vmem:[%s1 + $0x7e0] sm:$0xff]
        %v476 = vld [vmem:[%s1 + $0x7e8] sm:$0xff]
        %v477 = vld [vmem:[%s1 + $0x7f0] sm:$0xff]
        %v478 = vld [vmem:[%s1 + $0x7f8] sm:$0xff]
        %v479 = vld [vmem:[%s1 + $0x800] sm:$0xff]
        %v480 = vld [vmem:[%s1 + $0x808] sm:$0xff]
        %v481 = vld [vmem:[%s1 + $0x810] sm:$0xff]
        %v482 = vld [vmem:[%s1 + $0x818] sm:$0xff]
        %v483 = vld [vmem:[%s1 + $0x820] sm:$0xff]
        %v484 = vld [vmem:[%s1 + $0x828] sm:$0xff]
        %v485 = vld [vmem:[%s1 + $0x830] sm:$0xff]
        %v486 = vld [vmem:[%s1 + $0x838] sm:$0xff]
        %v487 = vld [vmem:[%s1 + $0x840] sm:$0xff]
        %v488 = vld [vmem:[%s1 + $0x848] sm:$0xff]
        %v489 = vld [vmem:[%s1 + $0x850] sm:$0xff]
        %v490 = vld [vmem:[%s1 + $0x858] sm:$0xff]
        %v491 = vld [vmem:[%s1 + $0x860] sm:$0xff]
        %v492 = vld [vmem:[%s1 + $0x868] sm:$0xff]
        %v493 = vld [vmem:[%s1 + $0x870] sm:$0xff]
        %v494 = vld [vmem:[%s1 + $0x878] sm:$0xff]
        %v495 = vld [vmem:[%s1 + $0x880] sm:$0xff]
        %v496 = vld [vmem:[%s1 + $0x888] sm:$0xff]
        %v497 = vld [vmem:[%s1 + $0x890] sm:$0xff]
        %v498 = vld [vmem:[%s1 + $0x898] sm:$0xff]
        %v499 = vld [vmem:[%s1 + $0x8a0] sm:$0xff]
        %v500 = vld [vmem:[%s1 + $0x8a8] sm:$0xff]
        %v501 = vld [vmem:[%s1 + $0x8b0] sm:$0xff]
        %v502 = vld [vmem:[%s1 + $0x8b8] sm:$0xff]
        %v503 = vld [vmem:[%s1 + $0x8c0] sm:$0xff]
        %v504 = vld [vmem:[%s1 + $0x8c8] sm:$0xff]
        %v505 = vld [vmem:[%s1 + $0x8d0] sm:$0xff]
        %v506 = vld [vmem:[%s1 + $0x8d8] sm:$0xff]
        %v507 = vld [vmem:[%s1 + $0x8e0] sm:$0xff]
        %v508 = vld [vmem:[%s1 + $0x8e8] sm:$0xff]
        %v509 = vld [vmem:[%s1 + $0x8f0] sm:$0xff]
        %v510 = vld [vmem:[%s1 + $0x8f8] sm:$0xff]
        %v511 = vld [vmem:[%s1 + $0x900] sm:$0xff]
        %v512 = vld [vmem:[%s1 + $0x908] sm:$0xff]
        %v513 = vld [vmem:[%s1 + $0x910] sm:$0xff]
        %v514 = vld [vmem:[%s1 + $0x918] sm:$0xff]
        %v515 = vld [vmem:[%s1 + $0x920] sm:$0xff]
        %v516 = vld [vmem:[%s1 + $0x928] sm:$0xff]
        %v517 = vld [vmem:[%s1 + $0x930] sm:$0xff]
        %v518 = vld [vmem:[%s1 + $0x938] sm:$0xff]
        %v519 = vld [vmem:[%s1 + $0x940] sm:$0xff]
        %v520 = vld [vmem:[%s1 + $0x948] sm:$0xff]
        %v521 = vld [vmem:[%s1 + $0x950] sm:$0xff]
        %v522 = vld [vmem:[%s1 + $0x958] sm:$0xff]
        %v523 = vld [vmem:[%s1 + $0x960] sm:$0xff]
        %v524 = vld [vmem:[%s1 + $0x968] sm:$0xff]
        %v525 = vld [vmem:[%s1 + $0x970] sm:$0xff]
        %v526 = vld [vmem:[%s1 + $0x978] sm:$0xff]
        %v527 = vld [vmem:[%s1 + $0x980] sm:$0xff]
        %v528 = vld [vmem:[%s1 + $0x988] sm:$0xff]
        %v529 = vld [vmem:[%s1 + $0x990] sm:$0xff]
        %v530 = vld [vmem:[%s1 + $0x998] sm:$0xff]
        %v531 = vld [vmem:[%s1 + $0x9a0] sm:$0xff]
        %v532 = vld [vmem:[%s1 + $0x9a8] sm:$0xff]
        %v533 = vld [vmem:[%s1 + $0x9b0] sm:$0xff]
        %v534 = vld [vmem:[%s1 + $0x9b8] sm:$0xff]
        %v535 = vld [vmem:[%s1 + $0x9c0] sm:$0xff]
        %v536 = vld [vmem:[%s1 + $0x9c8] sm:$0xff]
        %v537 = vld [vmem:[%s1 + $0x9d0] sm:$0xff]
        %v538 = vld [vmem:[%s1 + $0x9d8] sm:$0xff]
        %v539 = vld [vmem:[%s1 + $0x9e0] sm:$0xff]
        %v540 = vld [vmem:[%s1 + $0x9e8] sm:$0xff]
        %v541 = vld [vmem:[%s1 + $0x9f0] sm:$0xff]
        %v542 = vld [vmem:[%s1 + $0x9f8] sm:$0xff]
        %v543 = vld [vmem:[%s1 + $0xa00] sm:$0xff]
        %v544 = vld [vmem:[%s1 + $0xa08] sm:$0xff]
        %v545 = vld [vmem:[%s1 + $0xa10] sm:$0xff]
        %v546 = vld [vmem:[%s1 + $0xa18] sm:$0xff]
        %v547 = vld [vmem:[%s1 + $0xa20] sm:$0xff]
        %v548 = vld [vmem:[%s1 + $0xa28] sm:$0xff]
        %v549 = vld [vmem:[%s1 + $0xa30] sm:$0xff]
        %v550 = vld [vmem:[%s1 + $0xa38] sm:$0xff]
        %v551 = vld [vmem:[%s1 + $0xa40] sm:$0xff]
        %v552 = vld [vmem:[%s1 + $0xa48] sm:$0xff]
        %v553 = vld [vmem:[%s1 + $0xa50] sm:$0xff]
        %v554 = vld [vmem:[%s1 + $0xa58] sm:$0xff]
        %v555 = vld [vmem:[%s1 + $0xa60] sm:$0xff]
        %v556 = vld [vmem:[%s1 + $0xa68] sm:$0xff]
        %v557 = vld [vmem:[%s1 + $0xa70] sm:$0xff]
        %v558 = vld [vmem:[%s1 + $0xa78] sm:$0xff]
        %v559 = vld [vmem:[%s1 + $0xa80] sm:$0xff]
        %v560 = vld [vmem:[%s1 + $0xa88] sm:$0xff]
        %v561 = vld [vmem:[%s1 + $0xa90] sm:$0xff]
        %v562 = vld [vmem:[%s1 + $0xa98] sm:$0xff]
        %v563 = vld [vmem:[%s1 + $0xaa0] sm:$0xff]
        %v564 = vld [vmem:[%s1 + $0xaa8] sm:$0xff]
        %v565 = vld [vmem:[%s1 + $0xab0] sm:$0xff]
        %v566 = vld [vmem:[%s1 + $0xab8] sm:$0xff]
        %v567 = vld [vmem:[%s1 + $0xac0] sm:$0xff]
        %v568 = vld [vmem:[%s1 + $0xac8] sm:$0xff]
        %v569 = vld [vmem:[%s1 + $0xad0] sm:$0xff]
        %v570 = vld [vmem:[%s1 + $0xad8] sm:$0xff]
        %v571 = vld [vmem:[%s1 + $0xae0] sm:$0xff]
        %v572 = vld [vmem:[%s1 + $0xae8] sm:$0xff]
        %v573 = vld [vmem:[%s1 + $0xaf0] sm:$0xff]
        %v574 = vld [vmem:[%s1 + $0xaf8] sm:$0xff]
        %v575 = vld [vmem:[%s1 + $0xb00] sm:$0xff]
        %v576 = vld [vmem:[%s1 + $0xb08] sm:$0xff]
        %v577 = vld [vmem:[%s1 + $0xb10] sm:$0xff]
        %v578 = vld [vmem:[%s1 + $0xb18] sm:$0xff]
        %v579 = vld [vmem:[%s1 + $0xb20] sm:$0xff]
        %v580 = vld [vmem:[%s1 + $0xb28] sm:$0xff]
        %v581 = vld [vmem:[%s1 + $0xb30] sm:$0xff]
        %v582 = vld [vmem:[%s1 + $0xb38] sm:$0xff]
        %v583 = vld [vmem:[%s1 + $0xb40] sm:$0xff]
        %v584 = vld [vmem:[%s1 + $0xb48] sm:$0xff]
        %v585 = vld [vmem:[%s1 + $0xb50] sm:$0xff]
        %v586 = vld [vmem:[%s1 + $0xb58] sm:$0xff]
        %v587 = vld [vmem:[%s1 + $0xb60] sm:$0xff]
        %v588 = vld [vmem:[%s1 + $0xb68] sm:$0xff]
        %v589 = vld [vmem:[%s1 + $0xb70] sm:$0xff]
        %v590 = vld [vmem:[%s1 + $0xb78] sm:$0xff]
        %v591 = vld [vmem:[%s1 + $0xb80] sm:$0xff]
        %v592 = vld [vmem:[%s1 + $0xb88] sm:$0xff]
        %v593 = vld [vmem:[%s1 + $0xb90] sm:$0xff]
        %v594 = vld [vmem:[%s1 + $0xb98] sm:$0xff]
        %v595 = vld [vmem:[%s1 + $0xba0] sm:$0xff]
        %v596 = vld [vmem:[%s1 + $0xba8] sm:$0xff]
        %v597 = vld [vmem:[%s1 + $0xbb0] sm:$0xff]
        %v598 = vld [vmem:[%s1 + $0xbb8] sm:$0xff]
        %v599 = vld [vmem:[%s1 + $0xbc0] sm:$0xff]
        %v600 = vld [vmem:[%s1 + $0xbc8] sm:$0xff]
        %v601 = vld [vmem:[%s1 + $0xbd0] sm:$0xff]
        %v602 = vld [vmem:[%s1 + $0xbd8] sm:$0xff]
        %v603 = vld [vmem:[%s1 + $0xbe0] sm:$0xff]
        %v604 = vld [vmem:[%s1 + $0xbe8] sm:$0xff]
        %v605 = vld [vmem:[%s1 + $0xbf0] sm:$0xff]
        %v606 = vld [vmem:[%s1 + $0xbf8] sm:$0xff]
        %v607 = vld [vmem:[%s2] sm:$0x3]
        %v609 = vlaneseq
        %v610 = vshrl.u32 %v609, 7
        %v611 = vsub.s32 0, %v610
        %v612 = vrot.slane %v607, %v611
        %v613 = vlaneseq
        %v614 = vshrl.u32 %v613, 7
        %v615 = vsub.s32 1, %v614
        %v616 = vrot.slane %v607, %v615
        %v667 = vunpack.c.l.b16 %v175
        %v668 = vunpack.c.h.b16 %v175
        %v669 = vunpack.c.l.b16 %v176
        %v670 = vunpack.c.h.b16 %v176
        %v671 = vunpack.c.l.b16 %v177
        %v672 = vunpack.c.h.b16 %v177
        %v673 = vunpack.c.l.b16 %v178
        %v674 = vunpack.c.h.b16 %v178
        %v675 = vunpack.c.l.b16 %v179
        %v676 = vunpack.c.h.b16 %v179
        %v677 = vunpack.c.l.b16 %v180
        %v678 = vunpack.c.h.b16 %v180
        %v679 = vunpack.c.l.b16 %v181
        %v680 = vunpack.c.h.b16 %v181
        %v681 = vunpack.c.l.b16 %v182
        %v682 = vunpack.c.h.b16 %v182
        %v683 = vunpack.c.l.b16 %v183
        %v684 = vunpack.c.h.b16 %v183
        %v685 = vunpack.c.l.b16 %v184
        %v686 = vunpack.c.h.b16 %v184
        %v687 = vunpack.c.l.b16 %v185
        %v688 = vunpack.c.h.b16 %v185
        %v689 = vunpack.c.l.b16 %v186
        %v690 = vunpack.c.h.b16 %v186
        %v691 = vunpack.c.l.b16 %v187
        %v692 = vunpack.c.h.b16 %v187
        %v693 = vunpack.c.l.b16 %v188
        %v694 = vunpack.c.h.b16 %v188
        %v695 = vunpack.c.l.b16 %v189
        %v696 = vunpack.c.h.b16 %v189
        %v697 = vunpack.c.l.b16 %v190
        %v698 = vunpack.c.h.b16 %v190
        %v699 = vunpack.c.l.b16 %v191
        %v700 = vunpack.c.h.b16 %v191
        %v701 = vunpack.c.l.b16 %v192
        %v702 = vunpack.c.h.b16 %v192
        %v703 = vunpack.c.l.b16 %v193
        %v704 = vunpack.c.h.b16 %v193
        %v705 = vunpack.c.l.b16 %v194
        %v706 = vunpack.c.h.b16 %v194
        %v707 = vunpack.c.l.b16 %v195
        %v708 = vunpack.c.h.b16 %v195
        %v709 = vunpack.c.l.b16 %v196
        %v710 = vunpack.c.h.b16 %v196
        %v711 = vunpack.c.l.b16 %v197
        %v712 = vunpack.c.h.b16 %v197
        %v713 = vunpack.c.l.b16 %v198
        %v714 = vunpack.c.h.b16 %v198
        %v715 = vunpack.c.l.b16 %v199
        %v716 = vunpack.c.h.b16 %v199
        %v717 = vunpack.c.l.b16 %v200
        %v718 = vunpack.c.h.b16 %v200
        %v719 = vunpack.c.l.b16 %v201
        %v720 = vunpack.c.h.b16 %v201
        %v721 = vunpack.c.l.b16 %v202
        %v722 = vunpack.c.h.b16 %v202
        %v723 = vunpack.c.l.b16 %v203
        %v724 = vunpack.c.h.b16 %v203
        %v725 = vunpack.c.l.b16 %v204
        %v726 = vunpack.c.h.b16 %v204
        %v727 = vunpack.c.l.b16 %v205
        %v728 = vunpack.c.h.b16 %v205
        %v729 = vunpack.c.l.b16 %v206
        %v730 = vunpack.c.h.b16 %v206
        %v731 = vunpack.c.l.b16 %v207
        %v732 = vunpack.c.h.b16 %v207
        %v733 = vunpack.c.l.b16 %v208
        %v734 = vunpack.c.h.b16 %v208
        %v735 = vunpack.c.l.b16 %v209
        %v736 = vunpack.c.h.b16 %v209
        %v737 = vunpack.c.l.b16 %v210
        %v738 = vunpack.c.h.b16 %v210
        %v739 = vunpack.c.l.b16 %v211
        %v740 = vunpack.c.h.b16 %v211
        %v741 = vunpack.c.l.b16 %v212
        %v742 = vunpack.c.h.b16 %v212
        %v743 = vunpack.c.l.b16 %v213
        %v744 = vunpack.c.h.b16 %v213
        %v745 = vunpack.c.l.b16 %v214
        %v746 = vunpack.c.h.b16 %v214
        %v747 = vunpack.c.l.b16 %v215
        %v748 = vunpack.c.h.b16 %v215
        %v749 = vunpack.c.l.b16 %v216
        %v750 = vunpack.c.h.b16 %v216
        %v751 = vunpack.c.l.b16 %v217
        %v752 = vunpack.c.h.b16 %v217
        %v753 = vunpack.c.l.b16 %v218
        %v754 = vunpack.c.h.b16 %v218
        %v755 = vunpack.c.l.b16 %v219
        %v756 = vunpack.c.h.b16 %v219
        %v757 = vunpack.c.l.b16 %v220
        %v758 = vunpack.c.h.b16 %v220
        %v759 = vunpack.c.l.b16 %v221
        %v760 = vunpack.c.h.b16 %v221
        %v761 = vunpack.c.l.b16 %v222
        %v762 = vunpack.c.h.b16 %v222
        %v763 = vpack.c.b16 %v691, %v667
        %v764 = vpack.c.b16 %v692, %v668
        %v765 = vpack.c.b16 %v693, %v669
        %v766 = vpack.c.b16 %v694, %v670
        %v767 = vpack.c.b16 %v695, %v671
        %v768 = vpack.c.b16 %v696, %v672
        %v769 = vpack.c.b16 %v697, %v673
        %v770 = vpack.c.b16 %v698, %v674
        %v771 = vpack.c.b16 %v699, %v675
        %v772 = vpack.c.b16 %v700, %v676
        %v773 = vpack.c.b16 %v701, %v677
        %v774 = vpack.c.b16 %v702, %v678
        %v775 = vpack.c.b16 %v703, %v679
        %v776 = vpack.c.b16 %v704, %v680
        %v777 = vpack.c.b16 %v705, %v681
        %v778 = vpack.c.b16 %v706, %v682
        %v779 = vpack.c.b16 %v707, %v683
        %v780 = vpack.c.b16 %v708, %v684
        %v781 = vpack.c.b16 %v709, %v685
        %v782 = vpack.c.b16 %v710, %v686
        %v783 = vpack.c.b16 %v711, %v687
        %v784 = vpack.c.b16 %v712, %v688
        %v785 = vpack.c.b16 %v713, %v689
        %v786 = vpack.c.b16 %v714, %v690
        %v787 = vpack.c.b16 %v739, %v715
        %v788 = vpack.c.b16 %v740, %v716
        %v789 = vpack.c.b16 %v741, %v717
        %v790 = vpack.c.b16 %v742, %v718
        %v791 = vpack.c.b16 %v743, %v719
        %v792 = vpack.c.b16 %v744, %v720
        %v793 = vpack.c.b16 %v745, %v721
        %v794 = vpack.c.b16 %v746, %v722
        %v795 = vpack.c.b16 %v747, %v723
        %v796 = vpack.c.b16 %v748, %v724
        %v797 = vpack.c.b16 %v749, %v725
        %v798 = vpack.c.b16 %v750, %v726
        %v799 = vpack.c.b16 %v751, %v727
        %v800 = vpack.c.b16 %v752, %v728
        %v801 = vpack.c.b16 %v753, %v729
        %v802 = vpack.c.b16 %v754, %v730
        %v803 = vpack.c.b16 %v755, %v731
        %v804 = vpack.c.b16 %v756, %v732
        %v805 = vpack.c.b16 %v757, %v733
        %v806 = vpack.c.b16 %v758, %v734
        %v807 = vpack.c.b16 %v759, %v735
        %v808 = vpack.c.b16 %v760, %v736
        %v809 = vpack.c.b16 %v761, %v737
        %v810 = vpack.c.b16 %v762, %v738
        %v1243 = vunpack.c.l.b16 %v223
        %v1244 = vunpack.c.h.b16 %v223
        %v1245 = vunpack.c.l.b16 %v224
        %v1246 = vunpack.c.h.b16 %v224
        %v1247 = vunpack.c.l.b16 %v225
        %v1248 = vunpack.c.h.b16 %v225
        %v1249 = vunpack.c.l.b16 %v226
        %v1250 = vunpack.c.h.b16 %v226
        %v1251 = vunpack.c.l.b16 %v227
        %v1252 = vunpack.c.h.b16 %v227
        %v1253 = vunpack.c.l.b16 %v228
        %v1254 = vunpack.c.h.b16 %v228
        %v1255 = vunpack.c.l.b16 %v229
        %v1256 = vunpack.c.h.b16 %v229
        %v1257 = vunpack.c.l.b16 %v230
        %v1258 = vunpack.c.h.b16 %v230
        %v1259 = vunpack.c.l.b16 %v231
        %v1260 = vunpack.c.h.b16 %v231
        %v1261 = vunpack.c.l.b16 %v232
        %v1262 = vunpack.c.h.b16 %v232
        %v1263 = vunpack.c.l.b16 %v233
        %v1264 = vunpack.c.h.b16 %v233
        %v1265 = vunpack.c.l.b16 %v234
        %v1266 = vunpack.c.h.b16 %v234
        %v1267 = vunpack.c.l.b16 %v235
        %v1268 = vunpack.c.h.b16 %v235
        %v1269 = vunpack.c.l.b16 %v236
        %v1270 = vunpack.c.h.b16 %v236
        %v1271 = vunpack.c.l.b16 %v237
        %v1272 = vunpack.c.h.b16 %v237
        %v1273 = vunpack.c.l.b16 %v238
        %v1274 = vunpack.c.h.b16 %v238
        %v1275 = vunpack.c.l.b16 %v239
        %v1276 = vunpack.c.h.b16 %v239
        %v1277 = vunpack.c.l.b16 %v240
        %v1278 = vunpack.c.h.b16 %v240
        %v1279 = vunpack.c.l.b16 %v241
        %v1280 = vunpack.c.h.b16 %v241
        %v1281 = vunpack.c.l.b16 %v242
        %v1282 = vunpack.c.h.b16 %v242
        %v1283 = vunpack.c.l.b16 %v243
        %v1284 = vunpack.c.h.b16 %v243
        %v1285 = vunpack.c.l.b16 %v244
        %v1286 = vunpack.c.h.b16 %v244
        %v1287 = vunpack.c.l.b16 %v245
        %v1288 = vunpack.c.h.b16 %v245
        %v1289 = vunpack.c.l.b16 %v246
        %v1290 = vunpack.c.h.b16 %v246
        %v1291 = vunpack.c.l.b16 %v247
        %v1292 = vunpack.c.h.b16 %v247
        %v1293 = vunpack.c.l.b16 %v248
        %v1294 = vunpack.c.h.b16 %v248
        %v1295 = vunpack.c.l.b16 %v249
        %v1296 = vunpack.c.h.b16 %v249
        %v1297 = vunpack.c.l.b16 %v250
        %v1298 = vunpack.c.h.b16 %v250
        %v1299 = vunpack.c.l.b16 %v251
        %v1300 = vunpack.c.h.b16 %v251
        %v1301 = vunpack.c.l.b16 %v252
        %v1302 = vunpack.c.h.b16 %v252
        %v1303 = vunpack.c.l.b16 %v253
        %v1304 = vunpack.c.h.b16 %v253
        %v1305 = vunpack.c.l.b16 %v254
        %v1306 = vunpack.c.h.b16 %v254
        %v1307 = vunpack.c.l.b16 %v255
        %v1308 = vunpack.c.h.b16 %v255
        %v1309 = vunpack.c.l.b16 %v256
        %v1310 = vunpack.c.h.b16 %v256
        %v1311 = vunpack.c.l.b16 %v257
        %v1312 = vunpack.c.h.b16 %v257
        %v1313 = vunpack.c.l.b16 %v258
        %v1314 = vunpack.c.h.b16 %v258
        %v1315 = vunpack.c.l.b16 %v259
        %v1316 = vunpack.c.h.b16 %v259
        %v1317 = vunpack.c.l.b16 %v260
        %v1318 = vunpack.c.h.b16 %v260
        %v1319 = vunpack.c.l.b16 %v261
        %v1320 = vunpack.c.h.b16 %v261
        %v1321 = vunpack.c.l.b16 %v262
        %v1322 = vunpack.c.h.b16 %v262
        %v1323 = vunpack.c.l.b16 %v263
        %v1324 = vunpack.c.h.b16 %v263
        %v1325 = vunpack.c.l.b16 %v264
        %v1326 = vunpack.c.h.b16 %v264
        %v1327 = vunpack.c.l.b16 %v265
        %v1328 = vunpack.c.h.b16 %v265
        %v1329 = vunpack.c.l.b16 %v266
        %v1330 = vunpack.c.h.b16 %v266
        %v1331 = vunpack.c.l.b16 %v267
        %v1332 = vunpack.c.h.b16 %v267
        %v1333 = vunpack.c.l.b16 %v268
        %v1334 = vunpack.c.h.b16 %v268
        %v1335 = vunpack.c.l.b16 %v269
        %v1336 = vunpack.c.h.b16 %v269
        %v1337 = vunpack.c.l.b16 %v270
        %v1338 = vunpack.c.h.b16 %v270
        %v1339 = vunpack.c.l.b16 %v271
        %v1340 = vunpack.c.h.b16 %v271
        %v1341 = vunpack.c.l.b16 %v272
        %v1342 = vunpack.c.h.b16 %v272
        %v1343 = vunpack.c.l.b16 %v273
        %v1344 = vunpack.c.h.b16 %v273
        %v1345 = vunpack.c.l.b16 %v274
        %v1346 = vunpack.c.h.b16 %v274
        %v1347 = vunpack.c.l.b16 %v275
        %v1348 = vunpack.c.h.b16 %v275
        %v1349 = vunpack.c.l.b16 %v276
        %v1350 = vunpack.c.h.b16 %v276
        %v1351 = vunpack.c.l.b16 %v277
        %v1352 = vunpack.c.h.b16 %v277
        %v1353 = vunpack.c.l.b16 %v278
        %v1354 = vunpack.c.h.b16 %v278
        %v1355 = vunpack.c.l.b16 %v279
        %v1356 = vunpack.c.h.b16 %v279
        %v1357 = vunpack.c.l.b16 %v280
        %v1358 = vunpack.c.h.b16 %v280
        %v1359 = vunpack.c.l.b16 %v281
        %v1360 = vunpack.c.h.b16 %v281
        %v1361 = vunpack.c.l.b16 %v282
        %v1362 = vunpack.c.h.b16 %v282
        %v1363 = vunpack.c.l.b16 %v283
        %v1364 = vunpack.c.h.b16 %v283
        %v1365 = vunpack.c.l.b16 %v284
        %v1366 = vunpack.c.h.b16 %v284
        %v1367 = vunpack.c.l.b16 %v285
        %v1368 = vunpack.c.h.b16 %v285
        %v1369 = vunpack.c.l.b16 %v286
        %v1370 = vunpack.c.h.b16 %v286
        %v1371 = vunpack.c.l.b16 %v287
        %v1372 = vunpack.c.h.b16 %v287
        %v1373 = vunpack.c.l.b16 %v288
        %v1374 = vunpack.c.h.b16 %v288
        %v1375 = vunpack.c.l.b16 %v289
        %v1376 = vunpack.c.h.b16 %v289
        %v1377 = vunpack.c.l.b16 %v290
        %v1378 = vunpack.c.h.b16 %v290
        %v1379 = vunpack.c.l.b16 %v291
        %v1380 = vunpack.c.h.b16 %v291
        %v1381 = vunpack.c.l.b16 %v292
        %v1382 = vunpack.c.h.b16 %v292
        %v1383 = vunpack.c.l.b16 %v293
        %v1384 = vunpack.c.h.b16 %v293
        %v1385 = vunpack.c.l.b16 %v294
        %v1386 = vunpack.c.h.b16 %v294
        %v1387 = vunpack.c.l.b16 %v295
        %v1388 = vunpack.c.h.b16 %v295
        %v1389 = vunpack.c.l.b16 %v296
        %v1390 = vunpack.c.h.b16 %v296
        %v1391 = vunpack.c.l.b16 %v297
        %v1392 = vunpack.c.h.b16 %v297
        %v1393 = vunpack.c.l.b16 %v298
        %v1394 = vunpack.c.h.b16 %v298
        %v1395 = vunpack.c.l.b16 %v299
        %v1396 = vunpack.c.h.b16 %v299
        %v1397 = vunpack.c.l.b16 %v300
        %v1398 = vunpack.c.h.b16 %v300
        %v1399 = vunpack.c.l.b16 %v301
        %v1400 = vunpack.c.h.b16 %v301
        %v1401 = vunpack.c.l.b16 %v302
        %v1402 = vunpack.c.h.b16 %v302
        %v1403 = vunpack.c.l.b16 %v303
        %v1404 = vunpack.c.h.b16 %v303
        %v1405 = vunpack.c.l.b16 %v304
        %v1406 = vunpack.c.h.b16 %v304
        %v1407 = vunpack.c.l.b16 %v305
        %v1408 = vunpack.c.h.b16 %v305
        %v1409 = vunpack.c.l.b16 %v306
        %v1410 = vunpack.c.h.b16 %v306
        %v1411 = vunpack.c.l.b16 %v307
        %v1412 = vunpack.c.h.b16 %v307
        %v1413 = vunpack.c.l.b16 %v308
        %v1414 = vunpack.c.h.b16 %v308
        %v1415 = vunpack.c.l.b16 %v309
        %v1416 = vunpack.c.h.b16 %v309
        %v1417 = vunpack.c.l.b16 %v310
        %v1418 = vunpack.c.h.b16 %v310
        %v1419 = vunpack.c.l.b16 %v311
        %v1420 = vunpack.c.h.b16 %v311
        %v1421 = vunpack.c.l.b16 %v312
        %v1422 = vunpack.c.h.b16 %v312
        %v1423 = vunpack.c.l.b16 %v313
        %v1424 = vunpack.c.h.b16 %v313
        %v1425 = vunpack.c.l.b16 %v314
        %v1426 = vunpack.c.h.b16 %v314
        %v1427 = vunpack.c.l.b16 %v315
        %v1428 = vunpack.c.h.b16 %v315
        %v1429 = vunpack.c.l.b16 %v316
        %v1430 = vunpack.c.h.b16 %v316
        %v1431 = vunpack.c.l.b16 %v317
        %v1432 = vunpack.c.h.b16 %v317
        %v1433 = vunpack.c.l.b16 %v318
        %v1434 = vunpack.c.h.b16 %v318
        %v1435 = vunpack.c.l.b16 %v319
        %v1436 = vunpack.c.h.b16 %v319
        %v1437 = vunpack.c.l.b16 %v320
        %v1438 = vunpack.c.h.b16 %v320
        %v1439 = vunpack.c.l.b16 %v321
        %v1440 = vunpack.c.h.b16 %v321
        %v1441 = vunpack.c.l.b16 %v322
        %v1442 = vunpack.c.h.b16 %v322
        %v1443 = vunpack.c.l.b16 %v323
        %v1444 = vunpack.c.h.b16 %v323
        %v1445 = vunpack.c.l.b16 %v324
        %v1446 = vunpack.c.h.b16 %v324
        %v1447 = vunpack.c.l.b16 %v325
        %v1448 = vunpack.c.h.b16 %v325
        %v1449 = vunpack.c.l.b16 %v326
        %v1450 = vunpack.c.h.b16 %v326
        %v1451 = vunpack.c.l.b16 %v327
        %v1452 = vunpack.c.h.b16 %v327
        %v1453 = vunpack.c.l.b16 %v328
        %v1454 = vunpack.c.h.b16 %v328
        %v1455 = vunpack.c.l.b16 %v329
        %v1456 = vunpack.c.h.b16 %v329
        %v1457 = vunpack.c.l.b16 %v330
        %v1458 = vunpack.c.h.b16 %v330
        %v1459 = vunpack.c.l.b16 %v331
        %v1460 = vunpack.c.h.b16 %v331
        %v1461 = vunpack.c.l.b16 %v332
        %v1462 = vunpack.c.h.b16 %v332
        %v1463 = vunpack.c.l.b16 %v333
        %v1464 = vunpack.c.h.b16 %v333
        %v1465 = vunpack.c.l.b16 %v334
        %v1466 = vunpack.c.h.b16 %v334
        %v1467 = vunpack.c.l.b16 %v335
        %v1468 = vunpack.c.h.b16 %v335
        %v1469 = vunpack.c.l.b16 %v336
        %v1470 = vunpack.c.h.b16 %v336
        %v1471 = vunpack.c.l.b16 %v337
        %v1472 = vunpack.c.h.b16 %v337
        %v1473 = vunpack.c.l.b16 %v338
        %v1474 = vunpack.c.h.b16 %v338
        %v1475 = vunpack.c.l.b16 %v339
        %v1476 = vunpack.c.h.b16 %v339
        %v1477 = vunpack.c.l.b16 %v340
        %v1478 = vunpack.c.h.b16 %v340
        %v1479 = vunpack.c.l.b16 %v341
        %v1480 = vunpack.c.h.b16 %v341
        %v1481 = vunpack.c.l.b16 %v342
        %v1482 = vunpack.c.h.b16 %v342
        %v1483 = vunpack.c.l.b16 %v343
        %v1484 = vunpack.c.h.b16 %v343
        %v1485 = vunpack.c.l.b16 %v344
        %v1486 = vunpack.c.h.b16 %v344
        %v1487 = vunpack.c.l.b16 %v345
        %v1488 = vunpack.c.h.b16 %v345
        %v1489 = vunpack.c.l.b16 %v346
        %v1490 = vunpack.c.h.b16 %v346
        %v1491 = vunpack.c.l.b16 %v347
        %v1492 = vunpack.c.h.b16 %v347
        %v1493 = vunpack.c.l.b16 %v348
        %v1494 = vunpack.c.h.b16 %v348
        %v1495 = vunpack.c.l.b16 %v349
        %v1496 = vunpack.c.h.b16 %v349
        %v1497 = vunpack.c.l.b16 %v350
        %v1498 = vunpack.c.h.b16 %v350
        %v1499 = vunpack.c.l.b16 %v351
        %v1500 = vunpack.c.h.b16 %v351
        %v1501 = vunpack.c.l.b16 %v352
        %v1502 = vunpack.c.h.b16 %v352
        %v1503 = vunpack.c.l.b16 %v353
        %v1504 = vunpack.c.h.b16 %v353
        %v1505 = vunpack.c.l.b16 %v354
        %v1506 = vunpack.c.h.b16 %v354
        %v1507 = vunpack.c.l.b16 %v355
        %v1508 = vunpack.c.h.b16 %v355
        %v1509 = vunpack.c.l.b16 %v356
        %v1510 = vunpack.c.h.b16 %v356
        %v1511 = vunpack.c.l.b16 %v357
        %v1512 = vunpack.c.h.b16 %v357
        %v1513 = vunpack.c.l.b16 %v358
        %v1514 = vunpack.c.h.b16 %v358
        %v1515 = vunpack.c.l.b16 %v359
        %v1516 = vunpack.c.h.b16 %v359
        %v1517 = vunpack.c.l.b16 %v360
        %v1518 = vunpack.c.h.b16 %v360
        %v1519 = vunpack.c.l.b16 %v361
        %v1520 = vunpack.c.h.b16 %v361
        %v1521 = vunpack.c.l.b16 %v362
        %v1522 = vunpack.c.h.b16 %v362
        %v1523 = vunpack.c.l.b16 %v363
        %v1524 = vunpack.c.h.b16 %v363
        %v1525 = vunpack.c.l.b16 %v364
        %v1526 = vunpack.c.h.b16 %v364
        %v1527 = vunpack.c.l.b16 %v365
        %v1528 = vunpack.c.h.b16 %v365
        %v1529 = vunpack.c.l.b16 %v366
        %v1530 = vunpack.c.h.b16 %v366
        %v1531 = vunpack.c.l.b16 %v367
        %v1532 = vunpack.c.h.b16 %v367
        %v1533 = vunpack.c.l.b16 %v368
        %v1534 = vunpack.c.h.b16 %v368
        %v1535 = vunpack.c.l.b16 %v369
        %v1536 = vunpack.c.h.b16 %v369
        %v1537 = vunpack.c.l.b16 %v370
        %v1538 = vunpack.c.h.b16 %v370
        %v1539 = vunpack.c.l.b16 %v371
        %v1540 = vunpack.c.h.b16 %v371
        %v1541 = vunpack.c.l.b16 %v372
        %v1542 = vunpack.c.h.b16 %v372
        %v1543 = vunpack.c.l.b16 %v373
        %v1544 = vunpack.c.h.b16 %v373
        %v1545 = vunpack.c.l.b16 %v374
        %v1546 = vunpack.c.h.b16 %v374
        %v1547 = vunpack.c.l.b16 %v375
        %v1548 = vunpack.c.h.b16 %v375
        %v1549 = vunpack.c.l.b16 %v376
        %v1550 = vunpack.c.h.b16 %v376
        %v1551 = vunpack.c.l.b16 %v377
        %v1552 = vunpack.c.h.b16 %v377
        %v1553 = vunpack.c.l.b16 %v378
        %v1554 = vunpack.c.h.b16 %v378
        %v1555 = vunpack.c.l.b16 %v379
        %v1556 = vunpack.c.h.b16 %v379
        %v1557 = vunpack.c.l.b16 %v380
        %v1558 = vunpack.c.h.b16 %v380
        %v1559 = vunpack.c.l.b16 %v381
        %v1560 = vunpack.c.h.b16 %v381
        %v1561 = vunpack.c.l.b16 %v382
        %v1562 = vunpack.c.h.b16 %v382
        %v1563 = vunpack.c.l.b16 %v383
        %v1564 = vunpack.c.h.b16 %v383
        %v1565 = vunpack.c.l.b16 %v384
        %v1566 = vunpack.c.h.b16 %v384
        %v1567 = vunpack.c.l.b16 %v385
        %v1568 = vunpack.c.h.b16 %v385
        %v1569 = vunpack.c.l.b16 %v386
        %v1570 = vunpack.c.h.b16 %v386
        %v1571 = vunpack.c.l.b16 %v387
        %v1572 = vunpack.c.h.b16 %v387
        %v1573 = vunpack.c.l.b16 %v388
        %v1574 = vunpack.c.h.b16 %v388
        %v1575 = vunpack.c.l.b16 %v389
        %v1576 = vunpack.c.h.b16 %v389
        %v1577 = vunpack.c.l.b16 %v390
        %v1578 = vunpack.c.h.b16 %v390
        %v1579 = vunpack.c.l.b16 %v391
        %v1580 = vunpack.c.h.b16 %v391
        %v1581 = vunpack.c.l.b16 %v392
        %v1582 = vunpack.c.h.b16 %v392
        %v1583 = vunpack.c.l.b16 %v393
        %v1584 = vunpack.c.h.b16 %v393
        %v1585 = vunpack.c.l.b16 %v394
        %v1586 = vunpack.c.h.b16 %v394
        %v1587 = vunpack.c.l.b16 %v395
        %v1588 = vunpack.c.h.b16 %v395
        %v1589 = vunpack.c.l.b16 %v396
        %v1590 = vunpack.c.h.b16 %v396
        %v1591 = vunpack.c.l.b16 %v397
        %v1592 = vunpack.c.h.b16 %v397
        %v1593 = vunpack.c.l.b16 %v398
        %v1594 = vunpack.c.h.b16 %v398
        %v1595 = vunpack.c.l.b16 %v399
        %v1596 = vunpack.c.h.b16 %v399
        %v1597 = vunpack.c.l.b16 %v400
        %v1598 = vunpack.c.h.b16 %v400
        %v1599 = vunpack.c.l.b16 %v401
        %v1600 = vunpack.c.h.b16 %v401
        %v1601 = vunpack.c.l.b16 %v402
        %v1602 = vunpack.c.h.b16 %v402
        %v1603 = vunpack.c.l.b16 %v403
        %v1604 = vunpack.c.h.b16 %v403
        %v1605 = vunpack.c.l.b16 %v404
        %v1606 = vunpack.c.h.b16 %v404
        %v1607 = vunpack.c.l.b16 %v405
        %v1608 = vunpack.c.h.b16 %v405
        %v1609 = vunpack.c.l.b16 %v406
        %v1610 = vunpack.c.h.b16 %v406
        %v1611 = vunpack.c.l.b16 %v407
        %v1612 = vunpack.c.h.b16 %v407
        %v1613 = vunpack.c.l.b16 %v408
        %v1614 = vunpack.c.h.b16 %v408
        %v1615 = vunpack.c.l.b16 %v409
        %v1616 = vunpack.c.h.b16 %v409
        %v1617 = vunpack.c.l.b16 %v410
        %v1618 = vunpack.c.h.b16 %v410
        %v1619 = vunpack.c.l.b16 %v411
        %v1620 = vunpack.c.h.b16 %v411
        %v1621 = vunpack.c.l.b16 %v412
        %v1622 = vunpack.c.h.b16 %v412
        %v1623 = vunpack.c.l.b16 %v413
        %v1624 = vunpack.c.h.b16 %v413
        %v1625 = vunpack.c.l.b16 %v414
        %v1626 = vunpack.c.h.b16 %v414
        %v1627 = vunpack.c.l.b16 %v415
        %v1628 = vunpack.c.h.b16 %v415
        %v1629 = vunpack.c.l.b16 %v416
        %v1630 = vunpack.c.h.b16 %v416
        %v1631 = vunpack.c.l.b16 %v417
        %v1632 = vunpack.c.h.b16 %v417
        %v1633 = vunpack.c.l.b16 %v418
        %v1634 = vunpack.c.h.b16 %v418
        %v1635 = vunpack.c.l.b16 %v419
        %v1636 = vunpack.c.h.b16 %v419
        %v1637 = vunpack.c.l.b16 %v420
        %v1638 = vunpack.c.h.b16 %v420
        %v1639 = vunpack.c.l.b16 %v421
        %v1640 = vunpack.c.h.b16 %v421
        %v1641 = vunpack.c.l.b16 %v422
        %v1642 = vunpack.c.h.b16 %v422
        %v1643 = vunpack.c.l.b16 %v423
        %v1644 = vunpack.c.h.b16 %v423
        %v1645 = vunpack.c.l.b16 %v424
        %v1646 = vunpack.c.h.b16 %v424
        %v1647 = vunpack.c.l.b16 %v425
        %v1648 = vunpack.c.h.b16 %v425
        %v1649 = vunpack.c.l.b16 %v426
        %v1650 = vunpack.c.h.b16 %v426
        %v1651 = vunpack.c.l.b16 %v427
        %v1652 = vunpack.c.h.b16 %v427
        %v1653 = vunpack.c.l.b16 %v428
        %v1654 = vunpack.c.h.b16 %v428
        %v1655 = vunpack.c.l.b16 %v429
        %v1656 = vunpack.c.h.b16 %v429
        %v1657 = vunpack.c.l.b16 %v430
        %v1658 = vunpack.c.h.b16 %v430
        %v1659 = vunpack.c.l.b16 %v431
        %v1660 = vunpack.c.h.b16 %v431
        %v1661 = vunpack.c.l.b16 %v432
        %v1662 = vunpack.c.h.b16 %v432
        %v1663 = vunpack.c.l.b16 %v433
        %v1664 = vunpack.c.h.b16 %v433
        %v1665 = vunpack.c.l.b16 %v434
        %v1666 = vunpack.c.h.b16 %v434
        %v1667 = vunpack.c.l.b16 %v435
        %v1668 = vunpack.c.h.b16 %v435
        %v1669 = vunpack.c.l.b16 %v436
        %v1670 = vunpack.c.h.b16 %v436
        %v1671 = vunpack.c.l.b16 %v437
        %v1672 = vunpack.c.h.b16 %v437
        %v1673 = vunpack.c.l.b16 %v438
        %v1674 = vunpack.c.h.b16 %v438
        %v1675 = vunpack.c.l.b16 %v439
        %v1676 = vunpack.c.h.b16 %v439
        %v1677 = vunpack.c.l.b16 %v440
        %v1678 = vunpack.c.h.b16 %v440
        %v1679 = vunpack.c.l.b16 %v441
        %v1680 = vunpack.c.h.b16 %v441
        %v1681 = vunpack.c.l.b16 %v442
        %v1682 = vunpack.c.h.b16 %v442
        %v1683 = vunpack.c.l.b16 %v443
        %v1684 = vunpack.c.h.b16 %v443
        %v1685 = vunpack.c.l.b16 %v444
        %v1686 = vunpack.c.h.b16 %v444
        %v1687 = vunpack.c.l.b16 %v445
        %v1688 = vunpack.c.h.b16 %v445
        %v1689 = vunpack.c.l.b16 %v446
        %v1690 = vunpack.c.h.b16 %v446
        %v1691 = vunpack.c.l.b16 %v447
        %v1692 = vunpack.c.h.b16 %v447
        %v1693 = vunpack.c.l.b16 %v448
        %v1694 = vunpack.c.h.b16 %v448
        %v1695 = vunpack.c.l.b16 %v449
        %v1696 = vunpack.c.h.b16 %v449
        %v1697 = vunpack.c.l.b16 %v450
        %v1698 = vunpack.c.h.b16 %v450
        %v1699 = vunpack.c.l.b16 %v451
        %v1700 = vunpack.c.h.b16 %v451
        %v1701 = vunpack.c.l.b16 %v452
        %v1702 = vunpack.c.h.b16 %v452
        %v1703 = vunpack.c.l.b16 %v453
        %v1704 = vunpack.c.h.b16 %v453
        %v1705 = vunpack.c.l.b16 %v454
        %v1706 = vunpack.c.h.b16 %v454
        %v1707 = vunpack.c.l.b16 %v455
        %v1708 = vunpack.c.h.b16 %v455
        %v1709 = vunpack.c.l.b16 %v456
        %v1710 = vunpack.c.h.b16 %v456
        %v1711 = vunpack.c.l.b16 %v457
        %v1712 = vunpack.c.h.b16 %v457
        %v1713 = vunpack.c.l.b16 %v458
        %v1714 = vunpack.c.h.b16 %v458
        %v1715 = vunpack.c.l.b16 %v459
        %v1716 = vunpack.c.h.b16 %v459
        %v1717 = vunpack.c.l.b16 %v460
        %v1718 = vunpack.c.h.b16 %v460
        %v1719 = vunpack.c.l.b16 %v461
        %v1720 = vunpack.c.h.b16 %v461
        %v1721 = vunpack.c.l.b16 %v462
        %v1722 = vunpack.c.h.b16 %v462
        %v1723 = vunpack.c.l.b16 %v463
        %v1724 = vunpack.c.h.b16 %v463
        %v1725 = vunpack.c.l.b16 %v464
        %v1726 = vunpack.c.h.b16 %v464
        %v1727 = vunpack.c.l.b16 %v465
        %v1728 = vunpack.c.h.b16 %v465
        %v1729 = vunpack.c.l.b16 %v466
        %v1730 = vunpack.c.h.b16 %v466
        %v1731 = vunpack.c.l.b16 %v467
        %v1732 = vunpack.c.h.b16 %v467
        %v1733 = vunpack.c.l.b16 %v468
        %v1734 = vunpack.c.h.b16 %v468
        %v1735 = vunpack.c.l.b16 %v469
        %v1736 = vunpack.c.h.b16 %v469
        %v1737 = vunpack.c.l.b16 %v470
        %v1738 = vunpack.c.h.b16 %v470
        %v1739 = vunpack.c.l.b16 %v471
        %v1740 = vunpack.c.h.b16 %v471
        %v1741 = vunpack.c.l.b16 %v472
        %v1742 = vunpack.c.h.b16 %v472
        %v1743 = vunpack.c.l.b16 %v473
        %v1744 = vunpack.c.h.b16 %v473
        %v1745 = vunpack.c.l.b16 %v474
        %v1746 = vunpack.c.h.b16 %v474
        %v1747 = vunpack.c.l.b16 %v475
        %v1748 = vunpack.c.h.b16 %v475
        %v1749 = vunpack.c.l.b16 %v476
        %v1750 = vunpack.c.h.b16 %v476
        %v1751 = vunpack.c.l.b16 %v477
        %v1752 = vunpack.c.h.b16 %v477
        %v1753 = vunpack.c.l.b16 %v478
        %v1754 = vunpack.c.h.b16 %v478
        %v1755 = vunpack.c.l.b16 %v479
        %v1756 = vunpack.c.h.b16 %v479
        %v1757 = vunpack.c.l.b16 %v480
        %v1758 = vunpack.c.h.b16 %v480
        %v1759 = vunpack.c.l.b16 %v481
        %v1760 = vunpack.c.h.b16 %v481
        %v1761 = vunpack.c.l.b16 %v482
        %v1762 = vunpack.c.h.b16 %v482
        %v1763 = vunpack.c.l.b16 %v483
        %v1764 = vunpack.c.h.b16 %v483
        %v1765 = vunpack.c.l.b16 %v484
        %v1766 = vunpack.c.h.b16 %v484
        %v1767 = vunpack.c.l.b16 %v485
        %v1768 = vunpack.c.h.b16 %v485
        %v1769 = vunpack.c.l.b16 %v486
        %v1770 = vunpack.c.h.b16 %v486
        %v1771 = vunpack.c.l.b16 %v487
        %v1772 = vunpack.c.h.b16 %v487
        %v1773 = vunpack.c.l.b16 %v488
        %v1774 = vunpack.c.h.b16 %v488
        %v1775 = vunpack.c.l.b16 %v489
        %v1776 = vunpack.c.h.b16 %v489
        %v1777 = vunpack.c.l.b16 %v490
        %v1778 = vunpack.c.h.b16 %v490
        %v1779 = vunpack.c.l.b16 %v491
        %v1780 = vunpack.c.h.b16 %v491
        %v1781 = vunpack.c.l.b16 %v492
        %v1782 = vunpack.c.h.b16 %v492
        %v1783 = vunpack.c.l.b16 %v493
        %v1784 = vunpack.c.h.b16 %v493
        %v1785 = vunpack.c.l.b16 %v494
        %v1786 = vunpack.c.h.b16 %v494
        %v1787 = vunpack.c.l.b16 %v495
        %v1788 = vunpack.c.h.b16 %v495
        %v1789 = vunpack.c.l.b16 %v496
        %v1790 = vunpack.c.h.b16 %v496
        %v1791 = vunpack.c.l.b16 %v497
        %v1792 = vunpack.c.h.b16 %v497
        %v1793 = vunpack.c.l.b16 %v498
        %v1794 = vunpack.c.h.b16 %v498
        %v1795 = vunpack.c.l.b16 %v499
        %v1796 = vunpack.c.h.b16 %v499
        %v1797 = vunpack.c.l.b16 %v500
        %v1798 = vunpack.c.h.b16 %v500
        %v1799 = vunpack.c.l.b16 %v501
        %v1800 = vunpack.c.h.b16 %v501
        %v1801 = vunpack.c.l.b16 %v502
        %v1802 = vunpack.c.h.b16 %v502
        %v1803 = vunpack.c.l.b16 %v503
        %v1804 = vunpack.c.h.b16 %v503
        %v1805 = vunpack.c.l.b16 %v504
        %v1806 = vunpack.c.h.b16 %v504
        %v1807 = vunpack.c.l.b16 %v505
        %v1808 = vunpack.c.h.b16 %v505
        %v1809 = vunpack.c.l.b16 %v506
        %v1810 = vunpack.c.h.b16 %v506
        %v1811 = vunpack.c.l.b16 %v507
        %v1812 = vunpack.c.h.b16 %v507
        %v1813 = vunpack.c.l.b16 %v508
        %v1814 = vunpack.c.h.b16 %v508
        %v1815 = vunpack.c.l.b16 %v509
        %v1816 = vunpack.c.h.b16 %v509
        %v1817 = vunpack.c.l.b16 %v510
        %v1818 = vunpack.c.h.b16 %v510
        %v1819 = vunpack.c.l.b16 %v511
        %v1820 = vunpack.c.h.b16 %v511
        %v1821 = vunpack.c.l.b16 %v512
        %v1822 = vunpack.c.h.b16 %v512
        %v1823 = vunpack.c.l.b16 %v513
        %v1824 = vunpack.c.h.b16 %v513
        %v1825 = vunpack.c.l.b16 %v514
        %v1826 = vunpack.c.h.b16 %v514
        %v1827 = vunpack.c.l.b16 %v515
        %v1828 = vunpack.c.h.b16 %v515
        %v1829 = vunpack.c.l.b16 %v516
        %v1830 = vunpack.c.h.b16 %v516
        %v1831 = vunpack.c.l.b16 %v517
        %v1832 = vunpack.c.h.b16 %v517
        %v1833 = vunpack.c.l.b16 %v518
        %v1834 = vunpack.c.h.b16 %v518
        %v1835 = vunpack.c.l.b16 %v519
        %v1836 = vunpack.c.h.b16 %v519
        %v1837 = vunpack.c.l.b16 %v520
        %v1838 = vunpack.c.h.b16 %v520
        %v1839 = vunpack.c.l.b16 %v521
        %v1840 = vunpack.c.h.b16 %v521
        %v1841 = vunpack.c.l.b16 %v522
        %v1842 = vunpack.c.h.b16 %v522
        %v1843 = vunpack.c.l.b16 %v523
        %v1844 = vunpack.c.h.b16 %v523
        %v1845 = vunpack.c.l.b16 %v524
        %v1846 = vunpack.c.h.b16 %v524
        %v1847 = vunpack.c.l.b16 %v525
        %v1848 = vunpack.c.h.b16 %v525
        %v1849 = vunpack.c.l.b16 %v526
        %v1850 = vunpack.c.h.b16 %v526
        %v1851 = vunpack.c.l.b16 %v527
        %v1852 = vunpack.c.h.b16 %v527
        %v1853 = vunpack.c.l.b16 %v528
        %v1854 = vunpack.c.h.b16 %v528
        %v1855 = vunpack.c.l.b16 %v529
        %v1856 = vunpack.c.h.b16 %v529
        %v1857 = vunpack.c.l.b16 %v530
        %v1858 = vunpack.c.h.b16 %v530
        %v1859 = vunpack.c.l.b16 %v531
        %v1860 = vunpack.c.h.b16 %v531
        %v1861 = vunpack.c.l.b16 %v532
        %v1862 = vunpack.c.h.b16 %v532
        %v1863 = vunpack.c.l.b16 %v533
        %v1864 = vunpack.c.h.b16 %v533
        %v1865 = vunpack.c.l.b16 %v534
        %v1866 = vunpack.c.h.b16 %v534
        %v1867 = vunpack.c.l.b16 %v535
        %v1868 = vunpack.c.h.b16 %v535
        %v1869 = vunpack.c.l.b16 %v536
        %v1870 = vunpack.c.h.b16 %v536
        %v1871 = vunpack.c.l.b16 %v537
        %v1872 = vunpack.c.h.b16 %v537
        %v1873 = vunpack.c.l.b16 %v538
        %v1874 = vunpack.c.h.b16 %v538
        %v1875 = vunpack.c.l.b16 %v539
        %v1876 = vunpack.c.h.b16 %v539
        %v1877 = vunpack.c.l.b16 %v540
        %v1878 = vunpack.c.h.b16 %v540
        %v1879 = vunpack.c.l.b16 %v541
        %v1880 = vunpack.c.h.b16 %v541
        %v1881 = vunpack.c.l.b16 %v542
        %v1882 = vunpack.c.h.b16 %v542
        %v1883 = vunpack.c.l.b16 %v543
        %v1884 = vunpack.c.h.b16 %v543
        %v1885 = vunpack.c.l.b16 %v544
        %v1886 = vunpack.c.h.b16 %v544
        %v1887 = vunpack.c.l.b16 %v545
        %v1888 = vunpack.c.h.b16 %v545
        %v1889 = vunpack.c.l.b16 %v546
        %v1890 = vunpack.c.h.b16 %v546
        %v1891 = vunpack.c.l.b16 %v547
        %v1892 = vunpack.c.h.b16 %v547
        %v1893 = vunpack.c.l.b16 %v548
        %v1894 = vunpack.c.h.b16 %v548
        %v1895 = vunpack.c.l.b16 %v549
        %v1896 = vunpack.c.h.b16 %v549
        %v1897 = vunpack.c.l.b16 %v550
        %v1898 = vunpack.c.h.b16 %v550
        %v1899 = vunpack.c.l.b16 %v551
        %v1900 = vunpack.c.h.b16 %v551
        %v1901 = vunpack.c.l.b16 %v552
        %v1902 = vunpack.c.h.b16 %v552
        %v1903 = vunpack.c.l.b16 %v553
        %v1904 = vunpack.c.h.b16 %v553
        %v1905 = vunpack.c.l.b16 %v554
        %v1906 = vunpack.c.h.b16 %v554
        %v1907 = vunpack.c.l.b16 %v555
        %v1908 = vunpack.c.h.b16 %v555
        %v1909 = vunpack.c.l.b16 %v556
        %v1910 = vunpack.c.h.b16 %v556
        %v1911 = vunpack.c.l.b16 %v557
        %v1912 = vunpack.c.h.b16 %v557
        %v1913 = vunpack.c.l.b16 %v558
        %v1914 = vunpack.c.h.b16 %v558
        %v1915 = vunpack.c.l.b16 %v559
        %v1916 = vunpack.c.h.b16 %v559
        %v1917 = vunpack.c.l.b16 %v560
        %v1918 = vunpack.c.h.b16 %v560
        %v1919 = vunpack.c.l.b16 %v561
        %v1920 = vunpack.c.h.b16 %v561
        %v1921 = vunpack.c.l.b16 %v562
        %v1922 = vunpack.c.h.b16 %v562
        %v1923 = vunpack.c.l.b16 %v563
        %v1924 = vunpack.c.h.b16 %v563
        %v1925 = vunpack.c.l.b16 %v564
        %v1926 = vunpack.c.h.b16 %v564
        %v1927 = vunpack.c.l.b16 %v565
        %v1928 = vunpack.c.h.b16 %v565
        %v1929 = vunpack.c.l.b16 %v566
        %v1930 = vunpack.c.h.b16 %v566
        %v1931 = vunpack.c.l.b16 %v567
        %v1932 = vunpack.c.h.b16 %v567
        %v1933 = vunpack.c.l.b16 %v568
        %v1934 = vunpack.c.h.b16 %v568
        %v1935 = vunpack.c.l.b16 %v569
        %v1936 = vunpack.c.h.b16 %v569
        %v1937 = vunpack.c.l.b16 %v570
        %v1938 = vunpack.c.h.b16 %v570
        %v1939 = vunpack.c.l.b16 %v571
        %v1940 = vunpack.c.h.b16 %v571
        %v1941 = vunpack.c.l.b16 %v572
        %v1942 = vunpack.c.h.b16 %v572
        %v1943 = vunpack.c.l.b16 %v573
        %v1944 = vunpack.c.h.b16 %v573
        %v1945 = vunpack.c.l.b16 %v574
        %v1946 = vunpack.c.h.b16 %v574
        %v1947 = vunpack.c.l.b16 %v575
        %v1948 = vunpack.c.h.b16 %v575
        %v1949 = vunpack.c.l.b16 %v576
        %v1950 = vunpack.c.h.b16 %v576
        %v1951 = vunpack.c.l.b16 %v577
        %v1952 = vunpack.c.h.b16 %v577
        %v1953 = vunpack.c.l.b16 %v578
        %v1954 = vunpack.c.h.b16 %v578
        %v1955 = vunpack.c.l.b16 %v579
        %v1956 = vunpack.c.h.b16 %v579
        %v1957 = vunpack.c.l.b16 %v580
        %v1958 = vunpack.c.h.b16 %v580
        %v1959 = vunpack.c.l.b16 %v581
        %v1960 = vunpack.c.h.b16 %v581
        %v1961 = vunpack.c.l.b16 %v582
        %v1962 = vunpack.c.h.b16 %v582
        %v1963 = vunpack.c.l.b16 %v583
        %v1964 = vunpack.c.h.b16 %v583
        %v1965 = vunpack.c.l.b16 %v584
        %v1966 = vunpack.c.h.b16 %v584
        %v1967 = vunpack.c.l.b16 %v585
        %v1968 = vunpack.c.h.b16 %v585
        %v1969 = vunpack.c.l.b16 %v586
        %v1970 = vunpack.c.h.b16 %v586
        %v1971 = vunpack.c.l.b16 %v587
        %v1972 = vunpack.c.h.b16 %v587
        %v1973 = vunpack.c.l.b16 %v588
        %v1974 = vunpack.c.h.b16 %v588
        %v1975 = vunpack.c.l.b16 %v589
        %v1976 = vunpack.c.h.b16 %v589
        %v1977 = vunpack.c.l.b16 %v590
        %v1978 = vunpack.c.h.b16 %v590
        %v1979 = vunpack.c.l.b16 %v591
        %v1980 = vunpack.c.h.b16 %v591
        %v1981 = vunpack.c.l.b16 %v592
        %v1982 = vunpack.c.h.b16 %v592
        %v1983 = vunpack.c.l.b16 %v593
        %v1984 = vunpack.c.h.b16 %v593
        %v1985 = vunpack.c.l.b16 %v594
        %v1986 = vunpack.c.h.b16 %v594
        %v1987 = vunpack.c.l.b16 %v595
        %v1988 = vunpack.c.h.b16 %v595
        %v1989 = vunpack.c.l.b16 %v596
        %v1990 = vunpack.c.h.b16 %v596
        %v1991 = vunpack.c.l.b16 %v597
        %v1992 = vunpack.c.h.b16 %v597
        %v1993 = vunpack.c.l.b16 %v598
        %v1994 = vunpack.c.h.b16 %v598
        %v1995 = vunpack.c.l.b16 %v599
        %v1996 = vunpack.c.h.b16 %v599
        %v1997 = vunpack.c.l.b16 %v600
        %v1998 = vunpack.c.h.b16 %v600
        %v1999 = vunpack.c.l.b16 %v601
        %v2000 = vunpack.c.h.b16 %v601
        %v2001 = vunpack.c.l.b16 %v602
        %v2002 = vunpack.c.h.b16 %v602
        %v2003 = vunpack.c.l.b16 %v603
        %v2004 = vunpack.c.h.b16 %v603
        %v2005 = vunpack.c.l.b16 %v604
        %v2006 = vunpack.c.h.b16 %v604
        %v2007 = vunpack.c.l.b16 %v605
        %v2008 = vunpack.c.h.b16 %v605
        %v2009 = vunpack.c.l.b16 %v606
        %v2010 = vunpack.c.h.b16 %v606
        %v2011 = vpack.c.b16 %v1245, %v1243
        %v2012 = vpack.c.b16 %v1246, %v1244
        %v2013 = vpack.c.b16 %v1249, %v1247
        %v2014 = vpack.c.b16 %v1250, %v1248
        %v2015 = vpack.c.b16 %v1253, %v1251
        %v2016 = vpack.c.b16 %v1254, %v1252
        %v2017 = vpack.c.b16 %v1257, %v1255
        %v2018 = vpack.c.b16 %v1258, %v1256
        %v2019 = vpack.c.b16 %v1261, %v1259
        %v2020 = vpack.c.b16 %v1262, %v1260
        %v2021 = vpack.c.b16 %v1265, %v1263
        %v2022 = vpack.c.b16 %v1266, %v1264
        %v2023 = vpack.c.b16 %v1269, %v1267
        %v2024 = vpack.c.b16 %v1270, %v1268
        %v2025 = vpack.c.b16 %v1273, %v1271
        %v2026 = vpack.c.b16 %v1274, %v1272
        %v2027 = vpack.c.b16 %v1277, %v1275
        %v2028 = vpack.c.b16 %v1278, %v1276
        %v2029 = vpack.c.b16 %v1281, %v1279
        %v2030 = vpack.c.b16 %v1282, %v1280
        %v2031 = vpack.c.b16 %v1285, %v1283
        %v2032 = vpack.c.b16 %v1286, %v1284
        %v2033 = vpack.c.b16 %v1289, %v1287
        %v2034 = vpack.c.b16 %v1290, %v1288
        %v2035 = vpack.c.b16 %v1293, %v1291
        %v2036 = vpack.c.b16 %v1294, %v1292
        %v2037 = vpack.c.b16 %v1297, %v1295
        %v2038 = vpack.c.b16 %v1298, %v1296
        %v2039 = vpack.c.b16 %v1301, %v1299
        %v2040 = vpack.c.b16 %v1302, %v1300
        %v2041 = vpack.c.b16 %v1305, %v1303
        %v2042 = vpack.c.b16 %v1306, %v1304
        %v2043 = vpack.c.b16 %v1309, %v1307
        %v2044 = vpack.c.b16 %v1310, %v1308
        %v2045 = vpack.c.b16 %v1313, %v1311
        %v2046 = vpack.c.b16 %v1314, %v1312
        %v2047 = vpack.c.b16 %v1317, %v1315
        %v2048 = vpack.c.b16 %v1318, %v1316
        %v2049 = vpack.c.b16 %v1321, %v1319
        %v2050 = vpack.c.b16 %v1322, %v1320
        %v2051 = vpack.c.b16 %v1325, %v1323
        %v2052 = vpack.c.b16 %v1326, %v1324
        %v2053 = vpack.c.b16 %v1329, %v1327
        %v2054 = vpack.c.b16 %v1330, %v1328
        %v2055 = vpack.c.b16 %v1333, %v1331
        %v2056 = vpack.c.b16 %v1334, %v1332
        %v2057 = vpack.c.b16 %v1337, %v1335
        %v2058 = vpack.c.b16 %v1338, %v1336
        %v2059 = vpack.c.b16 %v1341, %v1339
        %v2060 = vpack.c.b16 %v1342, %v1340
        %v2061 = vpack.c.b16 %v1345, %v1343
        %v2062 = vpack.c.b16 %v1346, %v1344
        %v2063 = vpack.c.b16 %v1349, %v1347
        %v2064 = vpack.c.b16 %v1350, %v1348
        %v2065 = vpack.c.b16 %v1353, %v1351
        %v2066 = vpack.c.b16 %v1354, %v1352
        %v2067 = vpack.c.b16 %v1357, %v1355
        %v2068 = vpack.c.b16 %v1358, %v1356
        %v2069 = vpack.c.b16 %v1361, %v1359
        %v2070 = vpack.c.b16 %v1362, %v1360
        %v2071 = vpack.c.b16 %v1365, %v1363
        %v2072 = vpack.c.b16 %v1366, %v1364
        %v2073 = vpack.c.b16 %v1369, %v1367
        %v2074 = vpack.c.b16 %v1370, %v1368
        %v2075 = vpack.c.b16 %v1373, %v1371
        %v2076 = vpack.c.b16 %v1374, %v1372
        %v2077 = vpack.c.b16 %v1377, %v1375
        %v2078 = vpack.c.b16 %v1378, %v1376
        %v2079 = vpack.c.b16 %v1381, %v1379
        %v2080 = vpack.c.b16 %v1382, %v1380
        %v2081 = vpack.c.b16 %v1385, %v1383
        %v2082 = vpack.c.b16 %v1386, %v1384
        %v2083 = vpack.c.b16 %v1389, %v1387
        %v2084 = vpack.c.b16 %v1390, %v1388
        %v2085 = vpack.c.b16 %v1393, %v1391
        %v2086 = vpack.c.b16 %v1394, %v1392
        %v2087 = vpack.c.b16 %v1397, %v1395
        %v2088 = vpack.c.b16 %v1398, %v1396
        %v2089 = vpack.c.b16 %v1401, %v1399
        %v2090 = vpack.c.b16 %v1402, %v1400
        %v2091 = vpack.c.b16 %v1405, %v1403
        %v2092 = vpack.c.b16 %v1406, %v1404
        %v2093 = vpack.c.b16 %v1409, %v1407
        %v2094 = vpack.c.b16 %v1410, %v1408
        %v2095 = vpack.c.b16 %v1413, %v1411
        %v2096 = vpack.c.b16 %v1414, %v1412
        %v2097 = vpack.c.b16 %v1417, %v1415
        %v2098 = vpack.c.b16 %v1418, %v1416
        %v2099 = vpack.c.b16 %v1421, %v1419
        %v2100 = vpack.c.b16 %v1422, %v1420
        %v2101 = vpack.c.b16 %v1425, %v1423
        %v2102 = vpack.c.b16 %v1426, %v1424
        %v2103 = vpack.c.b16 %v1429, %v1427
        %v2104 = vpack.c.b16 %v1430, %v1428
        %v2105 = vpack.c.b16 %v1433, %v1431
        %v2106 = vpack.c.b16 %v1434, %v1432
        %v2107 = vpack.c.b16 %v1437, %v1435
        %v2108 = vpack.c.b16 %v1438, %v1436
        %v2109 = vpack.c.b16 %v1441, %v1439
        %v2110 = vpack.c.b16 %v1442, %v1440
        %v2111 = vpack.c.b16 %v1445, %v1443
        %v2112 = vpack.c.b16 %v1446, %v1444
        %v2113 = vpack.c.b16 %v1449, %v1447
        %v2114 = vpack.c.b16 %v1450, %v1448
        %v2115 = vpack.c.b16 %v1453, %v1451
        %v2116 = vpack.c.b16 %v1454, %v1452
        %v2117 = vpack.c.b16 %v1457, %v1455
        %v2118 = vpack.c.b16 %v1458, %v1456
        %v2119 = vpack.c.b16 %v1461, %v1459
        %v2120 = vpack.c.b16 %v1462, %v1460
        %v2121 = vpack.c.b16 %v1465, %v1463
        %v2122 = vpack.c.b16 %v1466, %v1464
        %v2123 = vpack.c.b16 %v1469, %v1467
        %v2124 = vpack.c.b16 %v1470, %v1468
        %v2125 = vpack.c.b16 %v1473, %v1471
        %v2126 = vpack.c.b16 %v1474, %v1472
        %v2127 = vpack.c.b16 %v1477, %v1475
        %v2128 = vpack.c.b16 %v1478, %v1476
        %v2129 = vpack.c.b16 %v1481, %v1479
        %v2130 = vpack.c.b16 %v1482, %v1480
        %v2131 = vpack.c.b16 %v1485, %v1483
        %v2132 = vpack.c.b16 %v1486, %v1484
        %v2133 = vpack.c.b16 %v1489, %v1487
        %v2134 = vpack.c.b16 %v1490, %v1488
        %v2135 = vpack.c.b16 %v1493, %v1491
        %v2136 = vpack.c.b16 %v1494, %v1492
        %v2137 = vpack.c.b16 %v1497, %v1495
        %v2138 = vpack.c.b16 %v1498, %v1496
        %v2139 = vpack.c.b16 %v1501, %v1499
        %v2140 = vpack.c.b16 %v1502, %v1500
        %v2141 = vpack.c.b16 %v1505, %v1503
        %v2142 = vpack.c.b16 %v1506, %v1504
        %v2143 = vpack.c.b16 %v1509, %v1507
        %v2144 = vpack.c.b16 %v1510, %v1508
        %v2145 = vpack.c.b16 %v1513, %v1511
        %v2146 = vpack.c.b16 %v1514, %v1512
        %v2147 = vpack.c.b16 %v1517, %v1515
        %v2148 = vpack.c.b16 %v1518, %v1516
        %v2149 = vpack.c.b16 %v1521, %v1519
        %v2150 = vpack.c.b16 %v1522, %v1520
        %v2151 = vpack.c.b16 %v1525, %v1523
        %v2152 = vpack.c.b16 %v1526, %v1524
        %v2153 = vpack.c.b16 %v1529, %v1527
        %v2154 = vpack.c.b16 %v1530, %v1528
        %v2155 = vpack.c.b16 %v1533, %v1531
        %v2156 = vpack.c.b16 %v1534, %v1532
        %v2157 = vpack.c.b16 %v1537, %v1535
        %v2158 = vpack.c.b16 %v1538, %v1536
        %v2159 = vpack.c.b16 %v1541, %v1539
        %v2160 = vpack.c.b16 %v1542, %v1540
        %v2161 = vpack.c.b16 %v1545, %v1543
        %v2162 = vpack.c.b16 %v1546, %v1544
        %v2163 = vpack.c.b16 %v1549, %v1547
        %v2164 = vpack.c.b16 %v1550, %v1548
        %v2165 = vpack.c.b16 %v1553, %v1551
        %v2166 = vpack.c.b16 %v1554, %v1552
        %v2167 = vpack.c.b16 %v1557, %v1555
        %v2168 = vpack.c.b16 %v1558, %v1556
        %v2169 = vpack.c.b16 %v1561, %v1559
        %v2170 = vpack.c.b16 %v1562, %v1560
        %v2171 = vpack.c.b16 %v1565, %v1563
        %v2172 = vpack.c.b16 %v1566, %v1564
        %v2173 = vpack.c.b16 %v1569, %v1567
        %v2174 = vpack.c.b16 %v1570, %v1568
        %v2175 = vpack.c.b16 %v1573, %v1571
        %v2176 = vpack.c.b16 %v1574, %v1572
        %v2177 = vpack.c.b16 %v1577, %v1575
        %v2178 = vpack.c.b16 %v1578, %v1576
        %v2179 = vpack.c.b16 %v1581, %v1579
        %v2180 = vpack.c.b16 %v1582, %v1580
        %v2181 = vpack.c.b16 %v1585, %v1583
        %v2182 = vpack.c.b16 %v1586, %v1584
        %v2183 = vpack.c.b16 %v1589, %v1587
        %v2184 = vpack.c.b16 %v1590, %v1588
        %v2185 = vpack.c.b16 %v1593, %v1591
        %v2186 = vpack.c.b16 %v1594, %v1592
        %v2187 = vpack.c.b16 %v1597, %v1595
        %v2188 = vpack.c.b16 %v1598, %v1596
        %v2189 = vpack.c.b16 %v1601, %v1599
        %v2190 = vpack.c.b16 %v1602, %v1600
        %v2191 = vpack.c.b16 %v1605, %v1603
        %v2192 = vpack.c.b16 %v1606, %v1604
        %v2193 = vpack.c.b16 %v1609, %v1607
        %v2194 = vpack.c.b16 %v1610, %v1608
        %v2195 = vpack.c.b16 %v1613, %v1611
        %v2196 = vpack.c.b16 %v1614, %v1612
        %v2197 = vpack.c.b16 %v1617, %v1615
        %v2198 = vpack.c.b16 %v1618, %v1616
        %v2199 = vpack.c.b16 %v1621, %v1619
        %v2200 = vpack.c.b16 %v1622, %v1620
        %v2201 = vpack.c.b16 %v1625, %v1623
        %v2202 = vpack.c.b16 %v1626, %v1624
        %v2203 = vpack.c.b16 %v1629, %v1627
        %v2204 = vpack.c.b16 %v1630, %v1628
        %v2205 = vpack.c.b16 %v1633, %v1631
        %v2206 = vpack.c.b16 %v1634, %v1632
        %v2207 = vpack.c.b16 %v1637, %v1635
        %v2208 = vpack.c.b16 %v1638, %v1636
        %v2209 = vpack.c.b16 %v1641, %v1639
        %v2210 = vpack.c.b16 %v1642, %v1640
        %v2211 = vpack.c.b16 %v1645, %v1643
        %v2212 = vpack.c.b16 %v1646, %v1644
        %v2213 = vpack.c.b16 %v1649, %v1647
        %v2214 = vpack.c.b16 %v1650, %v1648
        %v2215 = vpack.c.b16 %v1653, %v1651
        %v2216 = vpack.c.b16 %v1654, %v1652
        %v2217 = vpack.c.b16 %v1657, %v1655
        %v2218 = vpack.c.b16 %v1658, %v1656
        %v2219 = vpack.c.b16 %v1661, %v1659
        %v2220 = vpack.c.b16 %v1662, %v1660
        %v2221 = vpack.c.b16 %v1665, %v1663
        %v2222 = vpack.c.b16 %v1666, %v1664
        %v2223 = vpack.c.b16 %v1669, %v1667
        %v2224 = vpack.c.b16 %v1670, %v1668
        %v2225 = vpack.c.b16 %v1673, %v1671
        %v2226 = vpack.c.b16 %v1674, %v1672
        %v2227 = vpack.c.b16 %v1677, %v1675
        %v2228 = vpack.c.b16 %v1678, %v1676
        %v2229 = vpack.c.b16 %v1681, %v1679
        %v2230 = vpack.c.b16 %v1682, %v1680
        %v2231 = vpack.c.b16 %v1685, %v1683
        %v2232 = vpack.c.b16 %v1686, %v1684
        %v2233 = vpack.c.b16 %v1689, %v1687
        %v2234 = vpack.c.b16 %v1690, %v1688
        %v2235 = vpack.c.b16 %v1693, %v1691
        %v2236 = vpack.c.b16 %v1694, %v1692
        %v2237 = vpack.c.b16 %v1697, %v1695
        %v2238 = vpack.c.b16 %v1698, %v1696
        %v2239 = vpack.c.b16 %v1701, %v1699
        %v2240 = vpack.c.b16 %v1702, %v1700
        %v2241 = vpack.c.b16 %v1705, %v1703
        %v2242 = vpack.c.b16 %v1706, %v1704
        %v2243 = vpack.c.b16 %v1709, %v1707
        %v2244 = vpack.c.b16 %v1710, %v1708
        %v2245 = vpack.c.b16 %v1713, %v1711
        %v2246 = vpack.c.b16 %v1714, %v1712
        %v2247 = vpack.c.b16 %v1717, %v1715
        %v2248 = vpack.c.b16 %v1718, %v1716
        %v2249 = vpack.c.b16 %v1721, %v1719
        %v2250 = vpack.c.b16 %v1722, %v1720
        %v2251 = vpack.c.b16 %v1725, %v1723
        %v2252 = vpack.c.b16 %v1726, %v1724
        %v2253 = vpack.c.b16 %v1729, %v1727
        %v2254 = vpack.c.b16 %v1730, %v1728
        %v2255 = vpack.c.b16 %v1733, %v1731
        %v2256 = vpack.c.b16 %v1734, %v1732
        %v2257 = vpack.c.b16 %v1737, %v1735
        %v2258 = vpack.c.b16 %v1738, %v1736
        %v2259 = vpack.c.b16 %v1741, %v1739
        %v2260 = vpack.c.b16 %v1742, %v1740
        %v2261 = vpack.c.b16 %v1745, %v1743
        %v2262 = vpack.c.b16 %v1746, %v1744
        %v2263 = vpack.c.b16 %v1749, %v1747
        %v2264 = vpack.c.b16 %v1750, %v1748
        %v2265 = vpack.c.b16 %v1753, %v1751
        %v2266 = vpack.c.b16 %v1754, %v1752
        %v2267 = vpack.c.b16 %v1757, %v1755
        %v2268 = vpack.c.b16 %v1758, %v1756
        %v2269 = vpack.c.b16 %v1761, %v1759
        %v2270 = vpack.c.b16 %v1762, %v1760
        %v2271 = vpack.c.b16 %v1765, %v1763
        %v2272 = vpack.c.b16 %v1766, %v1764
        %v2273 = vpack.c.b16 %v1769, %v1767
        %v2274 = vpack.c.b16 %v1770, %v1768
        %v2275 = vpack.c.b16 %v1773, %v1771
        %v2276 = vpack.c.b16 %v1774, %v1772
        %v2277 = vpack.c.b16 %v1777, %v1775
        %v2278 = vpack.c.b16 %v1778, %v1776
        %v2279 = vpack.c.b16 %v1781, %v1779
        %v2280 = vpack.c.b16 %v1782, %v1780
        %v2281 = vpack.c.b16 %v1785, %v1783
        %v2282 = vpack.c.b16 %v1786, %v1784
        %v2283 = vpack.c.b16 %v1789, %v1787
        %v2284 = vpack.c.b16 %v1790, %v1788
        %v2285 = vpack.c.b16 %v1793, %v1791
        %v2286 = vpack.c.b16 %v1794, %v1792
        %v2287 = vpack.c.b16 %v1797, %v1795
        %v2288 = vpack.c.b16 %v1798, %v1796
        %v2289 = vpack.c.b16 %v1801, %v1799
        %v2290 = vpack.c.b16 %v1802, %v1800
        %v2291 = vpack.c.b16 %v1805, %v1803
        %v2292 = vpack.c.b16 %v1806, %v1804
        %v2293 = vpack.c.b16 %v1809, %v1807
        %v2294 = vpack.c.b16 %v1810, %v1808
        %v2295 = vpack.c.b16 %v1813, %v1811
        %v2296 = vpack.c.b16 %v1814, %v1812
        %v2297 = vpack.c.b16 %v1817, %v1815
        %v2298 = vpack.c.b16 %v1818, %v1816
        %v2299 = vpack.c.b16 %v1821, %v1819
        %v2300 = vpack.c.b16 %v1822, %v1820
        %v2301 = vpack.c.b16 %v1825, %v1823
        %v2302 = vpack.c.b16 %v1826, %v1824
        %v2303 = vpack.c.b16 %v1829, %v1827
        %v2304 = vpack.c.b16 %v1830, %v1828
        %v2305 = vpack.c.b16 %v1833, %v1831
        %v2306 = vpack.c.b16 %v1834, %v1832
        %v2307 = vpack.c.b16 %v1837, %v1835
        %v2308 = vpack.c.b16 %v1838, %v1836
        %v2309 = vpack.c.b16 %v1841, %v1839
        %v2310 = vpack.c.b16 %v1842, %v1840
        %v2311 = vpack.c.b16 %v1845, %v1843
        %v2312 = vpack.c.b16 %v1846, %v1844
        %v2313 = vpack.c.b16 %v1849, %v1847
        %v2314 = vpack.c.b16 %v1850, %v1848
        %v2315 = vpack.c.b16 %v1853, %v1851
        %v2316 = vpack.c.b16 %v1854, %v1852
        %v2317 = vpack.c.b16 %v1857, %v1855
        %v2318 = vpack.c.b16 %v1858, %v1856
        %v2319 = vpack.c.b16 %v1861, %v1859
        %v2320 = vpack.c.b16 %v1862, %v1860
        %v2321 = vpack.c.b16 %v1865, %v1863
        %v2322 = vpack.c.b16 %v1866, %v1864
        %v2323 = vpack.c.b16 %v1869, %v1867
        %v2324 = vpack.c.b16 %v1870, %v1868
        %v2325 = vpack.c.b16 %v1873, %v1871
        %v2326 = vpack.c.b16 %v1874, %v1872
        %v2327 = vpack.c.b16 %v1877, %v1875
        %v2328 = vpack.c.b16 %v1878, %v1876
        %v2329 = vpack.c.b16 %v1881, %v1879
        %v2330 = vpack.c.b16 %v1882, %v1880
        %v2331 = vpack.c.b16 %v1885, %v1883
        %v2332 = vpack.c.b16 %v1886, %v1884
        %v2333 = vpack.c.b16 %v1889, %v1887
        %v2334 = vpack.c.b16 %v1890, %v1888
        %v2335 = vpack.c.b16 %v1893, %v1891
        %v2336 = vpack.c.b16 %v1894, %v1892
        %v2337 = vpack.c.b16 %v1897, %v1895
        %v2338 = vpack.c.b16 %v1898, %v1896
        %v2339 = vpack.c.b16 %v1901, %v1899
        %v2340 = vpack.c.b16 %v1902, %v1900
        %v2341 = vpack.c.b16 %v1905, %v1903
        %v2342 = vpack.c.b16 %v1906, %v1904
        %v2343 = vpack.c.b16 %v1909, %v1907
        %v2344 = vpack.c.b16 %v1910, %v1908
        %v2345 = vpack.c.b16 %v1913, %v1911
        %v2346 = vpack.c.b16 %v1914, %v1912
        %v2347 = vpack.c.b16 %v1917, %v1915
        %v2348 = vpack.c.b16 %v1918, %v1916
        %v2349 = vpack.c.b16 %v1921, %v1919
        %v2350 = vpack.c.b16 %v1922, %v1920
        %v2351 = vpack.c.b16 %v1925, %v1923
        %v2352 = vpack.c.b16 %v1926, %v1924
        %v2353 = vpack.c.b16 %v1929, %v1927
        %v2354 = vpack.c.b16 %v1930, %v1928
        %v2355 = vpack.c.b16 %v1933, %v1931
        %v2356 = vpack.c.b16 %v1934, %v1932
        %v2357 = vpack.c.b16 %v1937, %v1935
        %v2358 = vpack.c.b16 %v1938, %v1936
        %v2359 = vpack.c.b16 %v1941, %v1939
        %v2360 = vpack.c.b16 %v1942, %v1940
        %v2361 = vpack.c.b16 %v1945, %v1943
        %v2362 = vpack.c.b16 %v1946, %v1944
        %v2363 = vpack.c.b16 %v1949, %v1947
        %v2364 = vpack.c.b16 %v1950, %v1948
        %v2365 = vpack.c.b16 %v1953, %v1951
        %v2366 = vpack.c.b16 %v1954, %v1952
        %v2367 = vpack.c.b16 %v1957, %v1955
        %v2368 = vpack.c.b16 %v1958, %v1956
        %v2369 = vpack.c.b16 %v1961, %v1959
        %v2370 = vpack.c.b16 %v1962, %v1960
        %v2371 = vpack.c.b16 %v1965, %v1963
        %v2372 = vpack.c.b16 %v1966, %v1964
        %v2373 = vpack.c.b16 %v1969, %v1967
        %v2374 = vpack.c.b16 %v1970, %v1968
        %v2375 = vpack.c.b16 %v1973, %v1971
        %v2376 = vpack.c.b16 %v1974, %v1972
        %v2377 = vpack.c.b16 %v1977, %v1975
        %v2378 = vpack.c.b16 %v1978, %v1976
        %v2379 = vpack.c.b16 %v1981, %v1979
        %v2380 = vpack.c.b16 %v1982, %v1980
        %v2381 = vpack.c.b16 %v1985, %v1983
        %v2382 = vpack.c.b16 %v1986, %v1984
        %v2383 = vpack.c.b16 %v1989, %v1987
        %v2384 = vpack.c.b16 %v1990, %v1988
        %v2385 = vpack.c.b16 %v1993, %v1991
        %v2386 = vpack.c.b16 %v1994, %v1992
        %v2387 = vpack.c.b16 %v1997, %v1995
        %v2388 = vpack.c.b16 %v1998, %v1996
        %v2389 = vpack.c.b16 %v2001, %v1999
        %v2390 = vpack.c.b16 %v2002, %v2000
        %v2391 = vpack.c.b16 %v2005, %v2003
        %v2392 = vpack.c.b16 %v2006, %v2004
        %v2393 = vpack.c.b16 %v2009, %v2007
        %v2394 = vpack.c.b16 %v2010, %v2008
        %2779 = vmatprep.subr.bf16.mxu0 %v2026
        %2780 = vmatpush1.bf16.msra.mxu0 %v2025
        %2781 = vmatprep.subr.bf16.mxu0 %v2024
        %2782 = vmatpush1.bf16.msra.mxu0 %v2023
        %2783 = vmatprep.subr.bf16.mxu0 %v2022
        %2784 = vmatpush1.bf16.msra.mxu0 %v2021
        %2785 = vmatprep.subr.bf16.mxu0 %v2020
        %2786 = vmatpush1.bf16.msra.mxu0 %v2019
        %2787 = vmatprep.subr.bf16.mxu0 %v2018
        %2788 = vmatpush1.bf16.msra.mxu0 %v2017
        %2789 = vmatprep.subr.bf16.mxu0 %v2016
        %2790 = vmatpush1.bf16.msra.mxu0 %v2015
        %2791 = vmatprep.subr.bf16.mxu0 %v2014
        %2792 = vmatpush1.bf16.msra.mxu0 %v2013
        %2793 = vmatprep.subr.bf16.mxu0 %v2012
        %2794 = vmatpush1.bf16.msra.mxu0 %v2011
        %2795 = vmatprep.subr.bf16.mxu0 %v2042
        %2796 = vmatpush2.bf16.msra.mxu0 %v2041
        %2797 = vmatprep.subr.bf16.mxu0 %v2040
        %2798 = vmatpush2.bf16.msra.mxu0 %v2039
        %2799 = vmatprep.subr.bf16.mxu0 %v2038
        %2800 = vmatpush2.bf16.msra.mxu0 %v2037
        %2801 = vmatprep.subr.bf16.mxu0 %v2036
        %2802 = vmatpush2.bf16.msra.mxu0 %v2035
        %2803 = vmatprep.subr.bf16.mxu0 %v2034
        %2804 = vmatpush2.bf16.msra.mxu0 %v2033
        %2805 = vmatprep.subr.bf16.mxu0 %v2032
        %2806 = vmatpush2.bf16.msra.mxu0 %v2031
        %2807 = vmatprep.subr.bf16.mxu0 %v2030
        %2808 = vmatpush2.bf16.msra.mxu0 %v2029
        %2809 = vmatprep.subr.bf16.mxu0 %v2028
        %2810 = vmatpush2.bf16.msra.mxu0 %v2027
        %2811 = vmatprep.mubr.bf16.mxu0 %v764
        %2812 = vmatmul.mubr.bf16.gmra.mxu0 %v763
        %v2813 = vpop.f32.mrf.mxu0
        %v2814 = vadd.f32 %v612, %v2813
        %v2815 = vpop.f32.mrf.mxu0
        %v2816 = vadd.f32 %v616, %v2815
        %v2817 = vpop.f32.mrf.mxu0
        %v2818 = vadd.f32 %v612, %v2817
        %v2819 = vpop.f32.mrf.mxu0
        %v2820 = vadd.f32 %v616, %v2819
        %2821 = vmatprep.mubr.bf16.mxu0 %v788
        %2822 = vmatmul.mubr.bf16.gmra.mxu0 %v787
        %v2823 = vpop.f32.mrf.mxu0
        %v2824 = vadd.f32 %v612, %v2823
        %v2825 = vpop.f32.mrf.mxu0
        %v2826 = vadd.f32 %v616, %v2825
        %v2827 = vpop.f32.mrf.mxu0
        %v2828 = vadd.f32 %v612, %v2827
        %v2829 = vpop.f32.mrf.mxu0
        %v2830 = vadd.f32 %v616, %v2829
        %2831 = vdwg.mxu0
        %2832 = vmatprep.subr.bf16.mxu0 %v2058
        %2833 = vmatpush1.bf16.msra.mxu0 %v2057
        %2834 = vmatprep.subr.bf16.mxu0 %v2056
        %2835 = vmatpush1.bf16.msra.mxu0 %v2055
        %2836 = vmatprep.subr.bf16.mxu0 %v2054
        %2837 = vmatpush1.bf16.msra.mxu0 %v2053
        %2838 = vmatprep.subr.bf16.mxu0 %v2052
        %2839 = vmatpush1.bf16.msra.mxu0 %v2051
        %2840 = vmatprep.subr.bf16.mxu0 %v2050
        %2841 = vmatpush1.bf16.msra.mxu0 %v2049
        %2842 = vmatprep.subr.bf16.mxu0 %v2048
        %2843 = vmatpush1.bf16.msra.mxu0 %v2047
        %2844 = vmatprep.subr.bf16.mxu0 %v2046
        %2845 = vmatpush1.bf16.msra.mxu0 %v2045
        %2846 = vmatprep.subr.bf16.mxu0 %v2044
        %2847 = vmatpush1.bf16.msra.mxu0 %v2043
        %2848 = vmatprep.subr.bf16.mxu0 %v2074
        %2849 = vmatpush2.bf16.msra.mxu0 %v2073
        %2850 = vmatprep.subr.bf16.mxu0 %v2072
        %2851 = vmatpush2.bf16.msra.mxu0 %v2071
        %2852 = vmatprep.subr.bf16.mxu0 %v2070
        %2853 = vmatpush2.bf16.msra.mxu0 %v2069
        %2854 = vmatprep.subr.bf16.mxu0 %v2068
        %2855 = vmatpush2.bf16.msra.mxu0 %v2067
        %2856 = vmatprep.subr.bf16.mxu0 %v2066
        %2857 = vmatpush2.bf16.msra.mxu0 %v2065
        %2858 = vmatprep.subr.bf16.mxu0 %v2064
        %2859 = vmatpush2.bf16.msra.mxu0 %v2063
        %2860 = vmatprep.subr.bf16.mxu0 %v2062
        %2861 = vmatpush2.bf16.msra.mxu0 %v2061
        %2862 = vmatprep.subr.bf16.mxu0 %v2060
        %2863 = vmatpush2.bf16.msra.mxu0 %v2059
        %2864 = vmatprep.mubr.bf16.mxu0 %v766
        %2865 = vmatmul.mubr.bf16.gmra.mxu0 %v765
        %v2866 = vpop.f32.mrf.mxu0
        %v2867 = vadd.f32 %v2814, %v2866
        %v2868 = vpop.f32.mrf.mxu0
        %v2869 = vadd.f32 %v2816, %v2868
        %v2870 = vpop.f32.mrf.mxu0
        %v2871 = vadd.f32 %v2818, %v2870
        %v2872 = vpop.f32.mrf.mxu0
        %v2873 = vadd.f32 %v2820, %v2872
        %2874 = vmatprep.mubr.bf16.mxu0 %v790
        %2875 = vmatmul.mubr.bf16.gmra.mxu0 %v789
        %v2876 = vpop.f32.mrf.mxu0
        %v2877 = vadd.f32 %v2824, %v2876
        %v2878 = vpop.f32.mrf.mxu0
        %v2879 = vadd.f32 %v2826, %v2878
        %v2880 = vpop.f32.mrf.mxu0
        %v2881 = vadd.f32 %v2828, %v2880
        %v2882 = vpop.f32.mrf.mxu0
        %v2883 = vadd.f32 %v2830, %v2882
        %2884 = vdwg.mxu0
        %2885 = vmatprep.subr.bf16.mxu0 %v2090
        %2886 = vmatpush1.bf16.msra.mxu0 %v2089
        %2887 = vmatprep.subr.bf16.mxu0 %v2088
        %2888 = vmatpush1.bf16.msra.mxu0 %v2087
        %2889 = vmatprep.subr.bf16.mxu0 %v2086
        %2890 = vmatpush1.bf16.msra.mxu0 %v2085
        %2891 = vmatprep.subr.bf16.mxu0 %v2084
        %2892 = vmatpush1.bf16.msra.mxu0 %v2083
        %2893 = vmatprep.subr.bf16.mxu0 %v2082
        %2894 = vmatpush1.bf16.msra.mxu0 %v2081
        %2895 = vmatprep.subr.bf16.mxu0 %v2080
        %2896 = vmatpush1.bf16.msra.mxu0 %v2079
        %2897 = vmatprep.subr.bf16.mxu0 %v2078
        %2898 = vmatpush1.bf16.msra.mxu0 %v2077
        %2899 = vmatprep.subr.bf16.mxu0 %v2076
        %2900 = vmatpush1.bf16.msra.mxu0 %v2075
        %2901 = vmatprep.subr.bf16.mxu0 %v2106
        %2902 = vmatpush2.bf16.msra.mxu0 %v2105
        %2903 = vmatprep.subr.bf16.mxu0 %v2104
        %2904 = vmatpush2.bf16.msra.mxu0 %v2103
        %2905 = vmatprep.subr.bf16.mxu0 %v2102
        %2906 = vmatpush2.bf16.msra.mxu0 %v2101
        %2907 = vmatprep.subr.bf16.mxu0 %v2100
        %2908 = vmatpush2.bf16.msra.mxu0 %v2099
        %2909 = vmatprep.subr.bf16.mxu0 %v2098
        %2910 = vmatpush2.bf16.msra.mxu0 %v2097
        %2911 = vmatprep.subr.bf16.mxu0 %v2096
        %2912 = vmatpush2.bf16.msra.mxu0 %v2095
        %2913 = vmatprep.subr.bf16.mxu0 %v2094
        %2914 = vmatpush2.bf16.msra.mxu0 %v2093
        %2915 = vmatprep.subr.bf16.mxu0 %v2092
        %2916 = vmatpush2.bf16.msra.mxu0 %v2091
        %2917 = vmatprep.mubr.bf16.mxu0 %v768
        %2918 = vmatmul.mubr.bf16.gmra.mxu0 %v767
        %v2919 = vpop.f32.mrf.mxu0
        %v2920 = vadd.f32 %v2867, %v2919
        %v2921 = vpop.f32.mrf.mxu0
        %v2922 = vadd.f32 %v2869, %v2921
        %v2923 = vpop.f32.mrf.mxu0
        %v2924 = vadd.f32 %v2871, %v2923
        %v2925 = vpop.f32.mrf.mxu0
        %v2926 = vadd.f32 %v2873, %v2925
        %2927 = vmatprep.mubr.bf16.mxu0 %v792
        %2928 = vmatmul.mubr.bf16.gmra.mxu0 %v791
        %v2929 = vpop.f32.mrf.mxu0
        %v2930 = vadd.f32 %v2877, %v2929
        %v2931 = vpop.f32.mrf.mxu0
        %v2932 = vadd.f32 %v2879, %v2931
        %v2933 = vpop.f32.mrf.mxu0
        %v2934 = vadd.f32 %v2881, %v2933
        %v2935 = vpop.f32.mrf.mxu0
        %v2936 = vadd.f32 %v2883, %v2935
        %2937 = vdwg.mxu0
        %2938 = vmatprep.subr.bf16.mxu0 %v2122
        %2939 = vmatpush1.bf16.msra.mxu0 %v2121
        %2940 = vmatprep.subr.bf16.mxu0 %v2120
        %2941 = vmatpush1.bf16.msra.mxu0 %v2119
        %2942 = vmatprep.subr.bf16.mxu0 %v2118
        %2943 = vmatpush1.bf16.msra.mxu0 %v2117
        %2944 = vmatprep.subr.bf16.mxu0 %v2116
        %2945 = vmatpush1.bf16.msra.mxu0 %v2115
        %2946 = vmatprep.subr.bf16.mxu0 %v2114
        %2947 = vmatpush1.bf16.msra.mxu0 %v2113
        %2948 = vmatprep.subr.bf16.mxu0 %v2112
        %2949 = vmatpush1.bf16.msra.mxu0 %v2111
        %2950 = vmatprep.subr.bf16.mxu0 %v2110
        %2951 = vmatpush1.bf16.msra.mxu0 %v2109
        %2952 = vmatprep.subr.bf16.mxu0 %v2108
        %2953 = vmatpush1.bf16.msra.mxu0 %v2107
        %2954 = vmatprep.subr.bf16.mxu0 %v2138
        %2955 = vmatpush2.bf16.msra.mxu0 %v2137
        %2956 = vmatprep.subr.bf16.mxu0 %v2136
        %2957 = vmatpush2.bf16.msra.mxu0 %v2135
        %2958 = vmatprep.subr.bf16.mxu0 %v2134
        %2959 = vmatpush2.bf16.msra.mxu0 %v2133
        %2960 = vmatprep.subr.bf16.mxu0 %v2132
        %2961 = vmatpush2.bf16.msra.mxu0 %v2131
        %2962 = vmatprep.subr.bf16.mxu0 %v2130
        %2963 = vmatpush2.bf16.msra.mxu0 %v2129
        %2964 = vmatprep.subr.bf16.mxu0 %v2128
        %2965 = vmatpush2.bf16.msra.mxu0 %v2127
        %2966 = vmatprep.subr.bf16.mxu0 %v2126
        %2967 = vmatpush2.bf16.msra.mxu0 %v2125
        %2968 = vmatprep.subr.bf16.mxu0 %v2124
        %2969 = vmatpush2.bf16.msra.mxu0 %v2123
        %2970 = vmatprep.mubr.bf16.mxu0 %v770
        %2971 = vmatmul.mubr.bf16.gmra.mxu0 %v769
        %v2972 = vpop.f32.mrf.mxu0
        %v2973 = vadd.f32 %v2920, %v2972
        %v2974 = vpop.f32.mrf.mxu0
        %v2975 = vadd.f32 %v2922, %v2974
        %v2976 = vpop.f32.mrf.mxu0
        %v2977 = vadd.f32 %v2924, %v2976
        %v2978 = vpop.f32.mrf.mxu0
        %v2979 = vadd.f32 %v2926, %v2978
        %2980 = vmatprep.mubr.bf16.mxu0 %v794
        %2981 = vmatmul.mubr.bf16.gmra.mxu0 %v793
        %v2982 = vpop.f32.mrf.mxu0
        %v2983 = vadd.f32 %v2930, %v2982
        %v2984 = vpop.f32.mrf.mxu0
        %v2985 = vadd.f32 %v2932, %v2984
        %v2986 = vpop.f32.mrf.mxu0
        %v2987 = vadd.f32 %v2934, %v2986
        %v2988 = vpop.f32.mrf.mxu0
        %v2989 = vadd.f32 %v2936, %v2988
        %2990 = vdwg.mxu0
        %2991 = vmatprep.subr.bf16.mxu0 %v2154
        %2992 = vmatpush1.bf16.msra.mxu0 %v2153
        %2993 = vmatprep.subr.bf16.mxu0 %v2152
        %2994 = vmatpush1.bf16.msra.mxu0 %v2151
        %2995 = vmatprep.subr.bf16.mxu0 %v2150
        %2996 = vmatpush1.bf16.msra.mxu0 %v2149
        %2997 = vmatprep.subr.bf16.mxu0 %v2148
        %2998 = vmatpush1.bf16.msra.mxu0 %v2147
        %2999 = vmatprep.subr.bf16.mxu0 %v2146
        %3000 = vmatpush1.bf16.msra.mxu0 %v2145
        %3001 = vmatprep.subr.bf16.mxu0 %v2144
        %3002 = vmatpush1.bf16.msra.mxu0 %v2143
        %3003 = vmatprep.subr.bf16.mxu0 %v2142
        %3004 = vmatpush1.bf16.msra.mxu0 %v2141
        %3005 = vmatprep.subr.bf16.mxu0 %v2140
        %3006 = vmatpush1.bf16.msra.mxu0 %v2139
        %3007 = vmatprep.subr.bf16.mxu0 %v2170
        %3008 = vmatpush2.bf16.msra.mxu0 %v2169
        %3009 = vmatprep.subr.bf16.mxu0 %v2168
        %3010 = vmatpush2.bf16.msra.mxu0 %v2167
        %3011 = vmatprep.subr.bf16.mxu0 %v2166
        %3012 = vmatpush2.bf16.msra.mxu0 %v2165
        %3013 = vmatprep.subr.bf16.mxu0 %v2164
        %3014 = vmatpush2.bf16.msra.mxu0 %v2163
        %3015 = vmatprep.subr.bf16.mxu0 %v2162
        %3016 = vmatpush2.bf16.msra.mxu0 %v2161
        %3017 = vmatprep.subr.bf16.mxu0 %v2160
        %3018 = vmatpush2.bf16.msra.mxu0 %v2159
        %3019 = vmatprep.subr.bf16.mxu0 %v2158
        %3020 = vmatpush2.bf16.msra.mxu0 %v2157
        %3021 = vmatprep.subr.bf16.mxu0 %v2156
        %3022 = vmatpush2.bf16.msra.mxu0 %v2155
        %3023 = vmatprep.mubr.bf16.mxu0 %v772
        %3024 = vmatmul.mubr.bf16.gmra.mxu0 %v771
        %v3025 = vpop.f32.mrf.mxu0
        %v3026 = vadd.f32 %v2973, %v3025
        %v3027 = vpop.f32.mrf.mxu0
        %v3028 = vadd.f32 %v2975, %v3027
        %v3029 = vpop.f32.mrf.mxu0
        %v3030 = vadd.f32 %v2977, %v3029
        %v3031 = vpop.f32.mrf.mxu0
        %v3032 = vadd.f32 %v2979, %v3031
        %3033 = vmatprep.mubr.bf16.mxu0 %v796
        %3034 = vmatmul.mubr.bf16.gmra.mxu0 %v795
        %v3035 = vpop.f32.mrf.mxu0
        %v3036 = vadd.f32 %v2983, %v3035
        %v3037 = vpop.f32.mrf.mxu0
        %v3038 = vadd.f32 %v2985, %v3037
        %v3039 = vpop.f32.mrf.mxu0
        %v3040 = vadd.f32 %v2987, %v3039
        %v3041 = vpop.f32.mrf.mxu0
        %v3042 = vadd.f32 %v2989, %v3041
        %3043 = vdwg.mxu0
        %3044 = vmatprep.subr.bf16.mxu0 %v2186
        %3045 = vmatpush1.bf16.msra.mxu0 %v2185
        %3046 = vmatprep.subr.bf16.mxu0 %v2184
        %3047 = vmatpush1.bf16.msra.mxu0 %v2183
        %3048 = vmatprep.subr.bf16.mxu0 %v2182
        %3049 = vmatpush1.bf16.msra.mxu0 %v2181
        %3050 = vmatprep.subr.bf16.mxu0 %v2180
        %3051 = vmatpush1.bf16.msra.mxu0 %v2179
        %3052 = vmatprep.subr.bf16.mxu0 %v2178
        %3053 = vmatpush1.bf16.msra.mxu0 %v2177
        %3054 = vmatprep.subr.bf16.mxu0 %v2176
        %3055 = vmatpush1.bf16.msra.mxu0 %v2175
        %3056 = vmatprep.subr.bf16.mxu0 %v2174
        %3057 = vmatpush1.bf16.msra.mxu0 %v2173
        %3058 = vmatprep.subr.bf16.mxu0 %v2172
        %3059 = vmatpush1.bf16.msra.mxu0 %v2171
        %3060 = vmatprep.subr.bf16.mxu0 %v2202
        %3061 = vmatpush2.bf16.msra.mxu0 %v2201
        %3062 = vmatprep.subr.bf16.mxu0 %v2200
        %3063 = vmatpush2.bf16.msra.mxu0 %v2199
        %3064 = vmatprep.subr.bf16.mxu0 %v2198
        %3065 = vmatpush2.bf16.msra.mxu0 %v2197
        %3066 = vmatprep.subr.bf16.mxu0 %v2196
        %3067 = vmatpush2.bf16.msra.mxu0 %v2195
        %3068 = vmatprep.subr.bf16.mxu0 %v2194
        %3069 = vmatpush2.bf16.msra.mxu0 %v2193
        %3070 = vmatprep.subr.bf16.mxu0 %v2192
        %3071 = vmatpush2.bf16.msra.mxu0 %v2191
        %3072 = vmatprep.subr.bf16.mxu0 %v2190
        %3073 = vmatpush2.bf16.msra.mxu0 %v2189
        %3074 = vmatprep.subr.bf16.mxu0 %v2188
        %3075 = vmatpush2.bf16.msra.mxu0 %v2187
        %3076 = vmatprep.mubr.bf16.mxu0 %v774
        %3077 = vmatmul.mubr.bf16.gmra.mxu0 %v773
        %v3078 = vpop.f32.mrf.mxu0
        %v3079 = vadd.f32 %v3026, %v3078
        %v3080 = vpop.f32.mrf.mxu0
        %v3081 = vadd.f32 %v3028, %v3080
        %v3082 = vpop.f32.mrf.mxu0
        %v3083 = vadd.f32 %v3030, %v3082
        %v3084 = vpop.f32.mrf.mxu0
        %v3085 = vadd.f32 %v3032, %v3084
        %3086 = vmatprep.mubr.bf16.mxu0 %v798
        %3087 = vmatmul.mubr.bf16.gmra.mxu0 %v797
        %v3088 = vpop.f32.mrf.mxu0
        %v3089 = vadd.f32 %v3036, %v3088
        %v3090 = vpop.f32.mrf.mxu0
        %v3091 = vadd.f32 %v3038, %v3090
        %v3092 = vpop.f32.mrf.mxu0
        %v3093 = vadd.f32 %v3040, %v3092
        %v3094 = vpop.f32.mrf.mxu0
        %v3095 = vadd.f32 %v3042, %v3094
        %3096 = vdwg.mxu0
        %3097 = vmatprep.subr.bf16.mxu0 %v2218
        %3098 = vmatpush1.bf16.msra.mxu0 %v2217
        %3099 = vmatprep.subr.bf16.mxu0 %v2216
        %3100 = vmatpush1.bf16.msra.mxu0 %v2215
        %3101 = vmatprep.subr.bf16.mxu0 %v2214
        %3102 = vmatpush1.bf16.msra.mxu0 %v2213
        %3103 = vmatprep.subr.bf16.mxu0 %v2212
        %3104 = vmatpush1.bf16.msra.mxu0 %v2211
        %3105 = vmatprep.subr.bf16.mxu0 %v2210
        %3106 = vmatpush1.bf16.msra.mxu0 %v2209
        %3107 = vmatprep.subr.bf16.mxu0 %v2208
        %3108 = vmatpush1.bf16.msra.mxu0 %v2207
        %3109 = vmatprep.subr.bf16.mxu0 %v2206
        %3110 = vmatpush1.bf16.msra.mxu0 %v2205
        %3111 = vmatprep.subr.bf16.mxu0 %v2204
        %3112 = vmatpush1.bf16.msra.mxu0 %v2203
        %3113 = vmatprep.subr.bf16.mxu0 %v2234
        %3114 = vmatpush2.bf16.msra.mxu0 %v2233
        %3115 = vmatprep.subr.bf16.mxu0 %v2232
        %3116 = vmatpush2.bf16.msra.mxu0 %v2231
        %3117 = vmatprep.subr.bf16.mxu0 %v2230
        %3118 = vmatpush2.bf16.msra.mxu0 %v2229
        %3119 = vmatprep.subr.bf16.mxu0 %v2228
        %3120 = vmatpush2.bf16.msra.mxu0 %v2227
        %3121 = vmatprep.subr.bf16.mxu0 %v2226
        %3122 = vmatpush2.bf16.msra.mxu0 %v2225
        %3123 = vmatprep.subr.bf16.mxu0 %v2224
        %3124 = vmatpush2.bf16.msra.mxu0 %v2223
        %3125 = vmatprep.subr.bf16.mxu0 %v2222
        %3126 = vmatpush2.bf16.msra.mxu0 %v2221
        %3127 = vmatprep.subr.bf16.mxu0 %v2220
        %3128 = vmatpush2.bf16.msra.mxu0 %v2219
        %3129 = vmatprep.mubr.bf16.mxu0 %v776
        %3130 = vmatmul.mubr.bf16.gmra.mxu0 %v775
        %v3131 = vpop.f32.mrf.mxu0
        %v3132 = vadd.f32 %v3079, %v3131
        %v3133 = vpop.f32.mrf.mxu0
        %v3134 = vadd.f32 %v3081, %v3133
        %v3135 = vpop.f32.mrf.mxu0
        %v3136 = vadd.f32 %v3083, %v3135
        %v3137 = vpop.f32.mrf.mxu0
        %v3138 = vadd.f32 %v3085, %v3137
        %3139 = vmatprep.mubr.bf16.mxu0 %v800
        %3140 = vmatmul.mubr.bf16.gmra.mxu0 %v799
        %v3141 = vpop.f32.mrf.mxu0
        %v3142 = vadd.f32 %v3089, %v3141
        %v3143 = vpop.f32.mrf.mxu0
        %v3144 = vadd.f32 %v3091, %v3143
        %v3145 = vpop.f32.mrf.mxu0
        %v3146 = vadd.f32 %v3093, %v3145
        %v3147 = vpop.f32.mrf.mxu0
        %v3148 = vadd.f32 %v3095, %v3147
        %3149 = vdwg.mxu0
        %3150 = vmatprep.subr.bf16.mxu0 %v2250
        %3151 = vmatpush1.bf16.msra.mxu0 %v2249
        %3152 = vmatprep.subr.bf16.mxu0 %v2248
        %3153 = vmatpush1.bf16.msra.mxu0 %v2247
        %3154 = vmatprep.subr.bf16.mxu0 %v2246
        %3155 = vmatpush1.bf16.msra.mxu0 %v2245
        %3156 = vmatprep.subr.bf16.mxu0 %v2244
        %3157 = vmatpush1.bf16.msra.mxu0 %v2243
        %3158 = vmatprep.subr.bf16.mxu0 %v2242
        %3159 = vmatpush1.bf16.msra.mxu0 %v2241
        %3160 = vmatprep.subr.bf16.mxu0 %v2240
        %3161 = vmatpush1.bf16.msra.mxu0 %v2239
        %3162 = vmatprep.subr.bf16.mxu0 %v2238
        %3163 = vmatpush1.bf16.msra.mxu0 %v2237
        %3164 = vmatprep.subr.bf16.mxu0 %v2236
        %3165 = vmatpush1.bf16.msra.mxu0 %v2235
        %3166 = vmatprep.subr.bf16.mxu0 %v2266
        %3167 = vmatpush2.bf16.msra.mxu0 %v2265
        %3168 = vmatprep.subr.bf16.mxu0 %v2264
        %3169 = vmatpush2.bf16.msra.mxu0 %v2263
        %3170 = vmatprep.subr.bf16.mxu0 %v2262
        %3171 = vmatpush2.bf16.msra.mxu0 %v2261
        %3172 = vmatprep.subr.bf16.mxu0 %v2260
        %3173 = vmatpush2.bf16.msra.mxu0 %v2259
        %3174 = vmatprep.subr.bf16.mxu0 %v2258
        %3175 = vmatpush2.bf16.msra.mxu0 %v2257
        %3176 = vmatprep.subr.bf16.mxu0 %v2256
        %3177 = vmatpush2.bf16.msra.mxu0 %v2255
        %3178 = vmatprep.subr.bf16.mxu0 %v2254
        %3179 = vmatpush2.bf16.msra.mxu0 %v2253
        %3180 = vmatprep.subr.bf16.mxu0 %v2252
        %3181 = vmatpush2.bf16.msra.mxu0 %v2251
        %3182 = vmatprep.mubr.bf16.mxu0 %v778
        %3183 = vmatmul.mubr.bf16.gmra.mxu0 %v777
        %v3184 = vpop.f32.mrf.mxu0
        %v3185 = vadd.f32 %v3132, %v3184
        %v3186 = vpop.f32.mrf.mxu0
        %v3187 = vadd.f32 %v3134, %v3186
        %v3188 = vpop.f32.mrf.mxu0
        %v3189 = vadd.f32 %v3136, %v3188
        %v3190 = vpop.f32.mrf.mxu0
        %v3191 = vadd.f32 %v3138, %v3190
        %3192 = vmatprep.mubr.bf16.mxu0 %v802
        %3193 = vmatmul.mubr.bf16.gmra.mxu0 %v801
        %v3194 = vpop.f32.mrf.mxu0
        %v3195 = vadd.f32 %v3142, %v3194
        %v3196 = vpop.f32.mrf.mxu0
        %v3197 = vadd.f32 %v3144, %v3196
        %v3198 = vpop.f32.mrf.mxu0
        %v3199 = vadd.f32 %v3146, %v3198
        %v3200 = vpop.f32.mrf.mxu0
        %v3201 = vadd.f32 %v3148, %v3200
        %3202 = vdwg.mxu0
        %3203 = vmatprep.subr.bf16.mxu0 %v2282
        %3204 = vmatpush1.bf16.msra.mxu0 %v2281
        %3205 = vmatprep.subr.bf16.mxu0 %v2280
        %3206 = vmatpush1.bf16.msra.mxu0 %v2279
        %3207 = vmatprep.subr.bf16.mxu0 %v2278
        %3208 = vmatpush1.bf16.msra.mxu0 %v2277
        %3209 = vmatprep.subr.bf16.mxu0 %v2276
        %3210 = vmatpush1.bf16.msra.mxu0 %v2275
        %3211 = vmatprep.subr.bf16.mxu0 %v2274
        %3212 = vmatpush1.bf16.msra.mxu0 %v2273
        %3213 = vmatprep.subr.bf16.mxu0 %v2272
        %3214 = vmatpush1.bf16.msra.mxu0 %v2271
        %3215 = vmatprep.subr.bf16.mxu0 %v2270
        %3216 = vmatpush1.bf16.msra.mxu0 %v2269
        %3217 = vmatprep.subr.bf16.mxu0 %v2268
        %3218 = vmatpush1.bf16.msra.mxu0 %v2267
        %3219 = vmatprep.subr.bf16.mxu0 %v2298
        %3220 = vmatpush2.bf16.msra.mxu0 %v2297
        %3221 = vmatprep.subr.bf16.mxu0 %v2296
        %3222 = vmatpush2.bf16.msra.mxu0 %v2295
        %3223 = vmatprep.subr.bf16.mxu0 %v2294
        %3224 = vmatpush2.bf16.msra.mxu0 %v2293
        %3225 = vmatprep.subr.bf16.mxu0 %v2292
        %3226 = vmatpush2.bf16.msra.mxu0 %v2291
        %3227 = vmatprep.subr.bf16.mxu0 %v2290
        %3228 = vmatpush2.bf16.msra.mxu0 %v2289
        %3229 = vmatprep.subr.bf16.mxu0 %v2288
        %3230 = vmatpush2.bf16.msra.mxu0 %v2287
        %3231 = vmatprep.subr.bf16.mxu0 %v2286
        %3232 = vmatpush2.bf16.msra.mxu0 %v2285
        %3233 = vmatprep.subr.bf16.mxu0 %v2284
        %3234 = vmatpush2.bf16.msra.mxu0 %v2283
        %3235 = vmatprep.mubr.bf16.mxu0 %v780
        %3236 = vmatmul.mubr.bf16.gmra.mxu0 %v779
        %v3237 = vpop.f32.mrf.mxu0
        %v3238 = vadd.f32 %v3185, %v3237
        %v3239 = vpop.f32.mrf.mxu0
        %v3240 = vadd.f32 %v3187, %v3239
        %v3241 = vpop.f32.mrf.mxu0
        %v3242 = vadd.f32 %v3189, %v3241
        %v3243 = vpop.f32.mrf.mxu0
        %v3244 = vadd.f32 %v3191, %v3243
        %3245 = vmatprep.mubr.bf16.mxu0 %v804
        %3246 = vmatmul.mubr.bf16.gmra.mxu0 %v803
        %v3247 = vpop.f32.mrf.mxu0
        %v3248 = vadd.f32 %v3195, %v3247
        %v3249 = vpop.f32.mrf.mxu0
        %v3250 = vadd.f32 %v3197, %v3249
        %v3251 = vpop.f32.mrf.mxu0
        %v3252 = vadd.f32 %v3199, %v3251
        %v3253 = vpop.f32.mrf.mxu0
        %v3254 = vadd.f32 %v3201, %v3253
        %3255 = vdwg.mxu0
        %3256 = vmatprep.subr.bf16.mxu0 %v2314
        %3257 = vmatpush1.bf16.msra.mxu0 %v2313
        %3258 = vmatprep.subr.bf16.mxu0 %v2312
        %3259 = vmatpush1.bf16.msra.mxu0 %v2311
        %3260 = vmatprep.subr.bf16.mxu0 %v2310
        %3261 = vmatpush1.bf16.msra.mxu0 %v2309
        %3262 = vmatprep.subr.bf16.mxu0 %v2308
        %3263 = vmatpush1.bf16.msra.mxu0 %v2307
        %3264 = vmatprep.subr.bf16.mxu0 %v2306
        %3265 = vmatpush1.bf16.msra.mxu0 %v2305
        %3266 = vmatprep.subr.bf16.mxu0 %v2304
        %3267 = vmatpush1.bf16.msra.mxu0 %v2303
        %3268 = vmatprep.subr.bf16.mxu0 %v2302
        %3269 = vmatpush1.bf16.msra.mxu0 %v2301
        %3270 = vmatprep.subr.bf16.mxu0 %v2300
        %3271 = vmatpush1.bf16.msra.mxu0 %v2299
        %3272 = vmatprep.subr.bf16.mxu0 %v2330
        %3273 = vmatpush2.bf16.msra.mxu0 %v2329
        %3274 = vmatprep.subr.bf16.mxu0 %v2328
        %3275 = vmatpush2.bf16.msra.mxu0 %v2327
        %3276 = vmatprep.subr.bf16.mxu0 %v2326
        %3277 = vmatpush2.bf16.msra.mxu0 %v2325
        %3278 = vmatprep.subr.bf16.mxu0 %v2324
        %3279 = vmatpush2.bf16.msra.mxu0 %v2323
        %3280 = vmatprep.subr.bf16.mxu0 %v2322
        %3281 = vmatpush2.bf16.msra.mxu0 %v2321
        %3282 = vmatprep.subr.bf16.mxu0 %v2320
        %3283 = vmatpush2.bf16.msra.mxu0 %v2319
        %3284 = vmatprep.subr.bf16.mxu0 %v2318
        %3285 = vmatpush2.bf16.msra.mxu0 %v2317
        %3286 = vmatprep.subr.bf16.mxu0 %v2316
        %3287 = vmatpush2.bf16.msra.mxu0 %v2315
        %3288 = vmatprep.mubr.bf16.mxu0 %v782
        %3289 = vmatmul.mubr.bf16.gmra.mxu0 %v781
        %v3290 = vpop.f32.mrf.mxu0
        %v3291 = vadd.f32 %v3238, %v3290
        %v3292 = vpop.f32.mrf.mxu0
        %v3293 = vadd.f32 %v3240, %v3292
        %v3294 = vpop.f32.mrf.mxu0
        %v3295 = vadd.f32 %v3242, %v3294
        %v3296 = vpop.f32.mrf.mxu0
        %v3297 = vadd.f32 %v3244, %v3296
        %3298 = vmatprep.mubr.bf16.mxu0 %v806
        %3299 = vmatmul.mubr.bf16.gmra.mxu0 %v805
        %v3300 = vpop.f32.mrf.mxu0
        %v3301 = vadd.f32 %v3248, %v3300
        %v3302 = vpop.f32.mrf.mxu0
        %v3303 = vadd.f32 %v3250, %v3302
        %v3304 = vpop.f32.mrf.mxu0
        %v3305 = vadd.f32 %v3252, %v3304
        %v3306 = vpop.f32.mrf.mxu0
        %v3307 = vadd.f32 %v3254, %v3306
        %3308 = vdwg.mxu0
        %3309 = vmatprep.subr.bf16.mxu0 %v2346
        %3310 = vmatpush1.bf16.msra.mxu0 %v2345
        %3311 = vmatprep.subr.bf16.mxu0 %v2344
        %3312 = vmatpush1.bf16.msra.mxu0 %v2343
        %3313 = vmatprep.subr.bf16.mxu0 %v2342
        %3314 = vmatpush1.bf16.msra.mxu0 %v2341
        %3315 = vmatprep.subr.bf16.mxu0 %v2340
        %3316 = vmatpush1.bf16.msra.mxu0 %v2339
        %3317 = vmatprep.subr.bf16.mxu0 %v2338
        %3318 = vmatpush1.bf16.msra.mxu0 %v2337
        %3319 = vmatprep.subr.bf16.mxu0 %v2336
        %3320 = vmatpush1.bf16.msra.mxu0 %v2335
        %3321 = vmatprep.subr.bf16.mxu0 %v2334
        %3322 = vmatpush1.bf16.msra.mxu0 %v2333
        %3323 = vmatprep.subr.bf16.mxu0 %v2332
        %3324 = vmatpush1.bf16.msra.mxu0 %v2331
        %3325 = vmatprep.subr.bf16.mxu0 %v2362
        %3326 = vmatpush2.bf16.msra.mxu0 %v2361
        %3327 = vmatprep.subr.bf16.mxu0 %v2360
        %3328 = vmatpush2.bf16.msra.mxu0 %v2359
        %3329 = vmatprep.subr.bf16.mxu0 %v2358
        %3330 = vmatpush2.bf16.msra.mxu0 %v2357
        %3331 = vmatprep.subr.bf16.mxu0 %v2356
        %3332 = vmatpush2.bf16.msra.mxu0 %v2355
        %3333 = vmatprep.subr.bf16.mxu0 %v2354
        %3334 = vmatpush2.bf16.msra.mxu0 %v2353
        %3335 = vmatprep.subr.bf16.mxu0 %v2352
        %3336 = vmatpush2.bf16.msra.mxu0 %v2351
        %3337 = vmatprep.subr.bf16.mxu0 %v2350
        %3338 = vmatpush2.bf16.msra.mxu0 %v2349
        %3339 = vmatprep.subr.bf16.mxu0 %v2348
        %3340 = vmatpush2.bf16.msra.mxu0 %v2347
        %3341 = vmatprep.mubr.bf16.mxu0 %v784
        %3342 = vmatmul.mubr.bf16.gmra.mxu0 %v783
        %v3343 = vpop.f32.mrf.mxu0
        %v3344 = vadd.f32 %v3291, %v3343
        %v3345 = vpop.f32.mrf.mxu0
        %v3346 = vadd.f32 %v3293, %v3345
        %v3347 = vpop.f32.mrf.mxu0
        %v3348 = vadd.f32 %v3295, %v3347
        %v3349 = vpop.f32.mrf.mxu0
        %v3350 = vadd.f32 %v3297, %v3349
        %3351 = vmatprep.mubr.bf16.mxu0 %v808
        %3352 = vmatmul.mubr.bf16.gmra.mxu0 %v807
        %v3353 = vpop.f32.mrf.mxu0
        %v3354 = vadd.f32 %v3301, %v3353
        %v3355 = vpop.f32.mrf.mxu0
        %v3356 = vadd.f32 %v3303, %v3355
        %v3357 = vpop.f32.mrf.mxu0
        %v3358 = vadd.f32 %v3305, %v3357
        %v3359 = vpop.f32.mrf.mxu0
        %v3360 = vadd.f32 %v3307, %v3359
        %3361 = vdwg.mxu0
        %3362 = vmatprep.subr.bf16.mxu0 %v2378
        %3363 = vmatpush1.bf16.msra.mxu0 %v2377
        %3364 = vmatprep.subr.bf16.mxu0 %v2376
        %3365 = vmatpush1.bf16.msra.mxu0 %v2375
        %3366 = vmatprep.subr.bf16.mxu0 %v2374
        %3367 = vmatpush1.bf16.msra.mxu0 %v2373
        %3368 = vmatprep.subr.bf16.mxu0 %v2372
        %3369 = vmatpush1.bf16.msra.mxu0 %v2371
        %3370 = vmatprep.subr.bf16.mxu0 %v2370
        %3371 = vmatpush1.bf16.msra.mxu0 %v2369
        %3372 = vmatprep.subr.bf16.mxu0 %v2368
        %3373 = vmatpush1.bf16.msra.mxu0 %v2367
        %3374 = vmatprep.subr.bf16.mxu0 %v2366
        %3375 = vmatpush1.bf16.msra.mxu0 %v2365
        %3376 = vmatprep.subr.bf16.mxu0 %v2364
        %3377 = vmatpush1.bf16.msra.mxu0 %v2363
        %3378 = vmatprep.subr.bf16.mxu0 %v2394
        %3379 = vmatpush2.bf16.msra.mxu0 %v2393
        %3380 = vmatprep.subr.bf16.mxu0 %v2392
        %3381 = vmatpush2.bf16.msra.mxu0 %v2391
        %3382 = vmatprep.subr.bf16.mxu0 %v2390
        %3383 = vmatpush2.bf16.msra.mxu0 %v2389
        %3384 = vmatprep.subr.bf16.mxu0 %v2388
        %3385 = vmatpush2.bf16.msra.mxu0 %v2387
        %3386 = vmatprep.subr.bf16.mxu0 %v2386
        %3387 = vmatpush2.bf16.msra.mxu0 %v2385
        %3388 = vmatprep.subr.bf16.mxu0 %v2384
        %3389 = vmatpush2.bf16.msra.mxu0 %v2383
        %3390 = vmatprep.subr.bf16.mxu0 %v2382
        %3391 = vmatpush2.bf16.msra.mxu0 %v2381
        %3392 = vmatprep.subr.bf16.mxu0 %v2380
        %3393 = vmatpush2.bf16.msra.mxu0 %v2379
        %3394 = vmatprep.mubr.bf16.mxu0 %v786
        %3395 = vmatmul.mubr.bf16.gmra.mxu0 %v785
        %v3396 = vpop.f32.mrf.mxu0
        %v3397 = vadd.f32 %v3344, %v3396
        %v3398 = vpop.f32.mrf.mxu0
        %v3399 = vadd.f32 %v3346, %v3398
        %v3400 = vpop.f32.mrf.mxu0
        %v3401 = vadd.f32 %v3348, %v3400
        %v3402 = vpop.f32.mrf.mxu0
        %v3403 = vadd.f32 %v3350, %v3402
        %3404 = vmatprep.mubr.bf16.mxu0 %v810
        %3405 = vmatmul.mubr.bf16.gmra.mxu0 %v809
        %v3406 = vpop.f32.mrf.mxu0
        %v3407 = vadd.f32 %v3354, %v3406
        %v3408 = vpop.f32.mrf.mxu0
        %v3409 = vadd.f32 %v3356, %v3408
        %v3410 = vpop.f32.mrf.mxu0
        %v3411 = vadd.f32 %v3358, %v3410
        %v3412 = vpop.f32.mrf.mxu0
        %v3413 = vadd.f32 %v3360, %v3412
        %3414 = vdwg.mxu0
        %v3415 = vmax.f32 %v3397, 0.0
        %v3416 = vmax.f32 %v3399, 0.0
        %v3417 = vmax.f32 %v3401, 0.0
        %v3418 = vmax.f32 %v3403, 0.0
        %v3419 = vmax.f32 %v3407, 0.0
        %v3420 = vmax.f32 %v3409, 0.0
        %v3421 = vmax.f32 %v3411, 0.0
        %v3422 = vmax.f32 %v3413, 0.0
        %v3423 = vadd.f32 %v3415, %v3416
        %v3424 = vadd.f32 %v3417, %v3418
        %v3425 = vadd.f32 %v3419, %v3420
        %v3426 = vadd.f32 %v3421, %v3422
        %v3427 = vmul.f32 %v3423, 0.5
        %v3428 = vmul.f32 %v3424, 0.5
        %v3429 = vmul.f32 %v3425, 0.5
        %v3430 = vmul.f32 %v3426, 0.5
        %3431 = vst [vmem:[%s166] sm:$0xff] %v3427
        %3432 = vst [vmem:[%s166 + $0x8] sm:$0xff] %v3428
        %3433 = vst [vmem:[%s166 + $0x10] sm:$0xff] %v3429
        %3434 = vst [vmem:[%s166 + $0x18] sm:$0xff] %v3430
        %s3435 = sand.u32 %s93, 1
        %s3436 = scalar_lea.sflag [#allocation3], %s3435
        %s3437 = sand.u32 %s93, 1
        %s3438 = smul.addr %s3437, 32
        %s3439 = scalar_lea.vmem [#allocation2], %s3438
        // Predicated region
        $region33: #{few_shot_cil_wo_rn2_encoder.1} parent=31 // pred_check
          %p3440 = pneg %p103
        $region34: #{few_shot_cil_wo_rn2_encoder.1} parent=31 // pred_check_branch
          %3442 = sbr.rel (%p3440) target = $region36
        $region35: #{few_shot_cil_wo_rn2_encoder.1} parent=31 // pred_region
          %s3443 = smul.u32 4, %s17
          %s3445 = ssub.s32 512, 512
          %3446 = vsyncadd %s3436, %s3445
          %s3447 = smul.addr %s3443, 128
          %s3448 = scalar_lea.hbm %s3, %s3447
          %s3449 = sshll.u32 %s3439, 4
          %s3450 = int_to_ptr.vmem [resolvable:$true] %s3449
          %3455 = dma.vmem_to_hbm [thread:$0]  %s3450, 512, %s3448, %s3436, 128, 128, 8
        $region36: #{few_shot_cil_wo_rn2_encoder.1} parent=31 // pred_fallthru
          _
      $region32: #{few_shot_cil_wo_rn2_encoder.1} parent=5 // pred_fallthru
        _
      %p3456 = scmp.le.s32.totalorder 2, %s12
      // Predicated region
      $region37: #{few_shot_cil_wo_rn2_encoder.1} parent=5 // pred_check
        %p3457 = pneg %p3456
      $region38: #{few_shot_cil_wo_rn2_encoder.1} parent=5 // pred_check_branch
        %3459 = sbr.rel (%p3457) target = $region40
      $region39: #{few_shot_cil_wo_rn2_encoder.1} parent=5 // pred_region
        %s3460 = ssub.s32 %s12, 2
        // Predicated region
        $region41: #{few_shot_cil_wo_rn2_encoder.1} parent=39 // pred_check
          %p3461 = pneg %p109
        $region42: #{few_shot_cil_wo_rn2_encoder.1} parent=39 // pred_check_branch
          %3463 = sbr.rel (%p3461) target = $region44
        $region43: #{few_shot_cil_wo_rn2_encoder.1} parent=39 // pred_region
          %s3464 = sand.u32 %s94, 1
          %s3465 = scalar_lea.sflag [#allocation3], %s3464
          %s3466 = sand.u32 %s94, 1
          %s3467 = smul.addr %s3466, 32
          %s3468 = scalar_lea.vmem [#allocation2], %s3467
          %3469 = dma.done %s3465, 512
        $region44: #{few_shot_cil_wo_rn2_encoder.1} parent=39 // pred_fallthru
          _
      $region40: #{few_shot_cil_wo_rn2_encoder.1} parent=5 // pred_fallthru
        _
    $region6: #{few_shot_cil_wo_rn2_encoder.1} parent=1 // loop_footer
      %s16 = sadd.s32 1, %s12
    $region7: #{few_shot_cil_wo_rn2_encoder.1} parent=1 // loop_footer_branch
      %11 = sbr.rel target = $region3
    $region8: #{few_shot_cil_wo_rn2_encoder.1} parent=1 // loop_exit
      _
    %3470 = vsyncpa [#allocation3], 1
    %s3471 = scalar_lea.sflag [#allocation3], 1
    %3472 = vsyncpa %s3471, 1

</llo_original>
